<compile_context>
chip_gen: v7x
topology: tpu7x:2x2x1
jax: 0.10.0
libtpu: 0.0.40
codegen_flags: <defaults>
</compile_context>

<pallas_src>
import functools

import jax
import jax.numpy as jnp
from jax.experimental import pallas as pl
from jax.experimental.pallas import tpu as pltpu

HIDDEN = 128
LANE = 128
SUBLANE = 8


def _round_up(x, m):
    return (x + m - 1) // m * m


def mi_net_rs_kernel(x_ref, mask_ref, w1_ref, b1_ref, w2_ref, b2_ref,
                     w3_ref, b3_ref, o_ref, *, bags_per_block, n_inst):
    # x_ref: (bags_per_block * n_inst, D_pad) — bags stacked into the MXU M dimension.
    x = x_ref[...]

    # fc_ : Linear(D,128) + ReLU
    h1 = jnp.maximum(
        jnp.dot(x, w1_ref[...], preferred_element_type=jnp.float32) + b1_ref[...], 0.0)
    # fc : Linear(128,128) + ReLU (same weight matrix used twice, as in the module)
    h2 = jnp.maximum(
        jnp.dot(h1, w2_ref[...], preferred_element_type=jnp.float32) + b2_ref[...], 0.0)
    h3 = jnp.maximum(
        jnp.dot(h2, w2_ref[...], preferred_element_type=jnp.float32) + b2_ref[...], 0.0)

    m = mask_ref[...]  # (3, bags_per_block*n_inst, 128) — Bernoulli(0.5) keep masks in {0,1}

    def pool(h, keep):
        # Per-bag max over instances. h >= 0 after ReLU, so the inverted-dropout
        # scale (x2) commutes with the max and is applied once after the sum.
        d = (h * keep).reshape(bags_per_block, n_inst, HIDDEN)
        return jnp.max(d, axis=1)                                   # (BB, 128)

    s = (pool(h1, m[0]) + pool(h2, m[1]) + pool(h3, m[2])) * 2.0    # (BB, 128)

    # out : Linear(128,1) + Sigmoid — W3 kept as (1,128): VPU multiply + lane reduce
    # instead of a (128,1) MXU matmul.
    logit = jnp.sum(s * w3_ref[...], axis=-1, keepdims=True) + b3_ref[...]  # (BB, 1)
    o_ref[...] = jax.nn.sigmoid(logit)


def make_dropout_masks(key, num_bags, n_inst, hidden=HIDDEN):
    """Bernoulli(0.5) keep masks for the three dropout sites (pass all-ones for eval)."""
    return jax.random.bernoulli(
        key, 0.5, (3, num_bags * n_inst, hidden)).astype(jnp.float32)


def mi_net_rs_forward(x_bags, params, dropout_masks, bags_per_block=None):
    """x_bags: (B, N, D) f32 (B bags, N instances each) -> (B, 1) bag probabilities.

    dropout_masks: (3, B*N, 128) float {0,1} keep masks (training-mode F.dropout,
    p=0.5, as in the reference module).  Pass jnp.ones(...) to disable dropout.
    """
    w1, b1, w2, b2, w3, b3 = params
    B, N, D = x_bags.shape
    H = HIDDEN

    if bags_per_block is None:
        bags_per_block = max(1, LANE // N)      # fill the MXU M dimension (~128 rows)
    BB = bags_per_block
    rows = BB * N
    assert rows % SUBLANE == 0, "bags_per_block * n_inst must be a multiple of 8"

    Bp = _round_up(B, BB)                       # pad bag count to a whole number of blocks
    Dp = _round_up(D, LANE)                     # lane-dense feature dim (zeros fold into W1)

    x2d = x_bags.reshape(B * N, D).astype(jnp.float32)
    x2d = jnp.pad(x2d, ((0, (Bp - B) * N), (0, Dp - D)))
    w1p = jnp.pad(w1, ((0, Dp - D), (0, 0)))
    masks = jnp.pad(dropout_masks, ((0, 0), (0, (Bp - B) * N), (0, 0)))

    grid = (Bp // BB,)
    const = lambda i: (0, 0)                    # weights/biases stay VMEM-resident

    out = pl.pallas_call(
        functools.partial(mi_net_rs_kernel, bags_per_block=BB, n_inst=N),
        out_shape=jax.ShapeDtypeStruct((Bp, 1), jnp.float32),
        grid=grid,
        in_specs=[
            pl.BlockSpec((rows, Dp), lambda i: (i, 0)),       # x rows of this bag-block
            pl.BlockSpec((3, rows, H), lambda i: (0, i, 0)),  # dropout keep masks
            pl.BlockSpec((Dp, H), const),                     # W1 (fc_.weight^T, padded)
            pl.BlockSpec((1, H), const),                      # b1
            pl.BlockSpec((H, H), const),                      # W2 (fc.weight^T, shared)
            pl.BlockSpec((1, H), const),                      # b2
            pl.BlockSpec((1, H), const),                      # W3 (out.weight, (1,128))
            pl.BlockSpec((1, 1), const),                      # b3
        ],
        out_specs=pl.BlockSpec((BB, 1), lambda i: (i, 0)),
        compiler_params=pltpu.CompilerParams(
            dimension_semantics=("parallel",)),               # bag blocks are independent
    )(x2d, masks, w1p, b1, w2, b2, w3, b3)

    return out[:B]


def init_params(key, input_dim, hidden=HIDDEN):
    """Deterministic init mimicking nn.Linear's U(-1/sqrt(fan_in), 1/sqrt(fan_in))."""
    k1, k2, k3, k4, k5, k6 = jax.random.split(key, 6)

    def unif(k, shape, fan_in):
        bound = 1.0 / (fan_in ** 0.5)
        return jax.random.uniform(k, shape, jnp.float32, -bound, bound)

    w1 = unif(k1, (input_dim, hidden), input_dim)   # fc_.weight^T
    b1 = unif(k2, (1, hidden), input_dim)           # fc_.bias
    w2 = unif(k3, (hidden, hidden), hidden)         # fc.weight^T (shared, used twice)
    b2 = unif(k4, (1, hidden), hidden)              # fc.bias
    w3 = unif(k5, (1, hidden), hidden)              # out.weight (native PyTorch layout)
    b3 = unif(k6, (1, 1), hidden)                   # out.bias
    return (w1, b1, w2, b2, w3, b3)


def ref_forward(x_bags, params, dropout_masks):
    """Pure-JAX reference (same math, same masks) for correctness checking."""
    w1, b1, w2, b2, w3, b3 = params
    B, N, D = x_bags.shape
    x2 = x_bags.reshape(B * N, D)
    relu = lambda v: jnp.maximum(v, 0.0)
    h1 = relu(x2 @ w1 + b1)
    h2 = relu(h1 @ w2 + b2)
    h3 = relu(h2 @ w2 + b2)

    def pool(h, keep):
        return jnp.max((h * keep).reshape(B, N, HIDDEN), axis=1) * 2.0

    s = pool(h1, dropout_masks[0]) + pool(h2, dropout_masks[1]) + pool(h3, dropout_masks[2])
    return jax.nn.sigmoid(jnp.sum(s * w3, axis=-1, keepdims=True) + b3)


if __name__ == "__main__":
    key = jax.random.PRNGKey(0)
    kx, kp, kd = jax.random.split(key, 3)

    B, N, D = 32, 8, 32          # 32 bags, 8 instances per bag, 32 input features
    x_bags = jax.random.normal(kx, (B, N, D), dtype=jnp.float32)
    params = init_params(kp, D)
    masks = make_dropout_masks(kd, B, N)

    out = mi_net_rs_forward(x_bags, params, masks)
    out = jax.block_until_ready(out)

    assert out.shape == (B, 1) and out.dtype == jnp.float32
    assert bool(jnp.all((out >= 0.0) & (out <= 1.0)))

    ref = ref_forward(x_bags, params, masks)
    assert bool(jnp.allclose(out, ref, atol=5e-3, rtol=0.0)), float(jnp.max(jnp.abs(out - ref)))

    print("KERNEL_OK")
</pallas_src>

<mosaic_0001>
module attributes {stable_mosaic.version = 11 : i64} {
  func.func @mi_net_rs_kernel(%arg0: i32, %arg1: memref<128x128xf32, #tpu.memory_space<vmem>>, %arg2: memref<3x128x128xf32, #tpu.memory_space<vmem>>, %arg3: memref<128x128xf32, #tpu.memory_space<vmem>>, %arg4: memref<1x128xf32, #tpu.memory_space<vmem>>, %arg5: memref<128x128xf32, #tpu.memory_space<vmem>>, %arg6: memref<1x128xf32, #tpu.memory_space<vmem>>, %arg7: memref<1x128xf32, #tpu.memory_space<vmem>>, %arg8: memref<1x1xf32, #tpu.memory_space<vmem>>, %arg9: memref<16x1xf32, #tpu.memory_space<vmem>>) attributes {dimension_semantics = [#tpu.dimension_semantics<parallel>], iteration_bounds = array<i64: 2>, scalar_prefetch = 0 : i64, scratch_operands = 0 : i64, tpu.core_type = #tpu.core_type<tc>, window_params = [{transform_indices = @transform_0, window_bounds = array<i64: 128, 128>}, {transform_indices = @transform_1, window_bounds = array<i64: 3, 128, 128>}, {pipeline_mode = #tpu.pipeline_mode<synchronous>, transform_indices = @transform_2, window_bounds = array<i64: 128, 128>}, {pipeline_mode = #tpu.pipeline_mode<synchronous>, transform_indices = @transform_3, window_bounds = array<i64: 1, 128>}, {pipeline_mode = #tpu.pipeline_mode<synchronous>, transform_indices = @transform_4, window_bounds = array<i64: 128, 128>}, {pipeline_mode = #tpu.pipeline_mode<synchronous>, transform_indices = @transform_5, window_bounds = array<i64: 1, 128>}, {pipeline_mode = #tpu.pipeline_mode<synchronous>, transform_indices = @transform_6, window_bounds = array<i64: 1, 128>}, {pipeline_mode = #tpu.pipeline_mode<synchronous>, transform_indices = @transform_7, window_bounds = array<i64: 1, 1>}, {transform_indices = @transform_8, window_bounds = array<i64: 16, 1>}]} {
    %c0 = arith.constant 0 : index
    %c0_0 = arith.constant 0 : index
    %0 = vector.load %arg1[%c0, %c0_0] : memref<128x128xf32, #tpu.memory_space<vmem>>, vector<128x128xf32>
    %c0_1 = arith.constant 0 : index
    %c0_2 = arith.constant 0 : index
    %1 = vector.load %arg3[%c0_1, %c0_2] : memref<128x128xf32, #tpu.memory_space<vmem>>, vector<128x128xf32>
    %cst = arith.constant dense<0.000000e+00> : vector<128x128xf32>
    %2 = tpu.matmul %0, %1, %cst {dimension_numbers = #tpu.dot_dimension_numbers<[1], [0], [0], [1], [0, 0, 1, 1], [], []>} : vector<128x128xf32>, vector<128x128xf32>, vector<128x128xf32> -> vector<128x128xf32>
    %c0_3 = arith.constant 0 : index
    %c0_4 = arith.constant 0 : index
    %3 = vector.load %arg4[%c0_3, %c0_4] : memref<1x128xf32, #tpu.memory_space<vmem>>, vector<1x128xf32>
    %4 = vector.broadcast %3 : vector<1x128xf32> to vector<128x128xf32>
    %5 = arith.addf %2, %4 : vector<128x128xf32>
    %cst_5 = arith.constant 0.000000e+00 : f32
    %6 = vector.broadcast %cst_5 : f32 to vector<128x128xf32>
    %7 = arith.maximumf %5, %6 : vector<128x128xf32>
    %c0_6 = arith.constant 0 : index
    %c0_7 = arith.constant 0 : index
    %8 = vector.load %arg5[%c0_6, %c0_7] : memref<128x128xf32, #tpu.memory_space<vmem>>, vector<128x128xf32>
    %cst_8 = arith.constant dense<0.000000e+00> : vector<128x128xf32>
    %9 = tpu.matmul %7, %8, %cst_8 {dimension_numbers = #tpu.dot_dimension_numbers<[1], [0], [0], [1], [0, 0, 1, 1], [], []>} : vector<128x128xf32>, vector<128x128xf32>, vector<128x128xf32> -> vector<128x128xf32>
    %c0_9 = arith.constant 0 : index
    %c0_10 = arith.constant 0 : index
    %10 = vector.load %arg6[%c0_9, %c0_10] : memref<1x128xf32, #tpu.memory_space<vmem>>, vector<1x128xf32>
    %11 = vector.broadcast %10 : vector<1x128xf32> to vector<128x128xf32>
    %12 = arith.addf %9, %11 : vector<128x128xf32>
    %cst_11 = arith.constant 0.000000e+00 : f32
    %13 = vector.broadcast %cst_11 : f32 to vector<128x128xf32>
    %14 = arith.maximumf %12, %13 : vector<128x128xf32>
    %c0_12 = arith.constant 0 : index
    %c0_13 = arith.constant 0 : index
    %15 = vector.load %arg5[%c0_12, %c0_13] : memref<128x128xf32, #tpu.memory_space<vmem>>, vector<128x128xf32>
    %cst_14 = arith.constant dense<0.000000e+00> : vector<128x128xf32>
    %16 = tpu.matmul %14, %15, %cst_14 {dimension_numbers = #tpu.dot_dimension_numbers<[1], [0], [0], [1], [0, 0, 1, 1], [], []>} : vector<128x128xf32>, vector<128x128xf32>, vector<128x128xf32> -> vector<128x128xf32>
    %c0_15 = arith.constant 0 : index
    %c0_16 = arith.constant 0 : index
    %17 = vector.load %arg6[%c0_15, %c0_16] : memref<1x128xf32, #tpu.memory_space<vmem>>, vector<1x128xf32>
    %18 = vector.broadcast %17 : vector<1x128xf32> to vector<128x128xf32>
    %19 = arith.addf %16, %18 : vector<128x128xf32>
    %cst_17 = arith.constant 0.000000e+00 : f32
    %20 = vector.broadcast %cst_17 : f32 to vector<128x128xf32>
    %21 = arith.maximumf %19, %20 : vector<128x128xf32>
    %c0_18 = arith.constant 0 : index
    %c0_19 = arith.constant 0 : index
    %c0_20 = arith.constant 0 : index
    %22 = vector.load %arg2[%c0_18, %c0_19, %c0_20] : memref<3x128x128xf32, #tpu.memory_space<vmem>>, vector<3x128x128xf32>
    %23 = vector.extract_strided_slice %22 {offsets = [0, 0, 0], sizes = [1, 128, 128], strides = [1, 1, 1]} : vector<3x128x128xf32> to vector<1x128x128xf32>
    %24 = vector.shape_cast %23 : vector<1x128x128xf32> to vector<128x128xf32>
    %25 = arith.mulf %7, %24 : vector<128x128xf32>
    %26 = vector.shape_cast %25 : vector<128x128xf32> to vector<16x8x128xf32>
    %cst_21 = arith.constant dense<0xFF800000> : vector<16x128xf32>
    %27 = vector.multi_reduction <maximumf>, %26, %cst_21 [1] : vector<16x8x128xf32> to vector<16x128xf32>
    %28 = vector.extract_strided_slice %22 {offsets = [1, 0, 0], sizes = [1, 128, 128], strides = [1, 1, 1]} : vector<3x128x128xf32> to vector<1x128x128xf32>
    %29 = vector.shape_cast %28 : vector<1x128x128xf32> to vector<128x128xf32>
    %30 = arith.mulf %14, %29 : vector<128x128xf32>
    %31 = vector.shape_cast %30 : vector<128x128xf32> to vector<16x8x128xf32>
    %cst_22 = arith.constant dense<0xFF800000> : vector<16x128xf32>
    %32 = vector.multi_reduction <maximumf>, %31, %cst_22 [1] : vector<16x8x128xf32> to vector<16x128xf32>
    %33 = arith.addf %27, %32 : vector<16x128xf32>
    %34 = vector.extract_strided_slice %22 {offsets = [2, 0, 0], sizes = [1, 128, 128], strides = [1, 1, 1]} : vector<3x128x128xf32> to vector<1x128x128xf32>
    %35 = vector.shape_cast %34 : vector<1x128x128xf32> to vector<128x128xf32>
    %36 = arith.mulf %21, %35 : vector<128x128xf32>
    %37 = vector.shape_cast %36 : vector<128x128xf32> to vector<16x8x128xf32>
    %cst_23 = arith.constant dense<0xFF800000> : vector<16x128xf32>
    %38 = vector.multi_reduction <maximumf>, %37, %cst_23 [1] : vector<16x8x128xf32> to vector<16x128xf32>
    %39 = arith.addf %33, %38 : vector<16x128xf32>
    %cst_24 = arith.constant 2.000000e+00 : f32
    %40 = vector.broadcast %cst_24 : f32 to vector<16x128xf32>
    %41 = arith.mulf %39, %40 : vector<16x128xf32>
    %c0_25 = arith.constant 0 : index
    %c0_26 = arith.constant 0 : index
    %42 = vector.load %arg7[%c0_25, %c0_26] : memref<1x128xf32, #tpu.memory_space<vmem>>, vector<1x128xf32>
    %43 = vector.broadcast %42 : vector<1x128xf32> to vector<16x128xf32>
    %44 = arith.mulf %41, %43 : vector<16x128xf32>
    %cst_27 = arith.constant dense<0.000000e+00> : vector<16xf32>
    %45 = vector.multi_reduction <add>, %44, %cst_27 [1] : vector<16x128xf32> to vector<16xf32>
    %46 = vector.shape_cast %45 : vector<16xf32> to vector<16x1xf32>
    %c0_28 = arith.constant 0 : index
    %c0_29 = arith.constant 0 : index
    %47 = vector.load %arg8[%c0_28, %c0_29] : memref<1x1xf32, #tpu.memory_space<vmem>>, vector<1x1xf32>
    %48 = vector.broadcast %47 : vector<1x1xf32> to vector<16x1xf32>
    %49 = arith.addf %46, %48 : vector<16x1xf32>
    %50 = arith.negf %49 : vector<16x1xf32>
    %51 = math.exp %50 : vector<16x1xf32>
    %cst_30 = arith.constant 1.000000e+00 : f32
    %52 = vector.broadcast %cst_30 : f32 to vector<16x1xf32>
    %53 = arith.addf %52, %51 : vector<16x1xf32>
    %54 = arith.divf %52, %53 : vector<16x1xf32>
    %c0_31 = arith.constant 0 : index
    %c0_32 = arith.constant 0 : index
    %55 = vector.load %arg9[%c0_31, %c0_32] : memref<16x1xf32, #tpu.memory_space<vmem>>, vector<16x1xf32>
    tpu.vector_store %arg9[%c0_31, %c0_32], %54 {strides = array<i32>} : memref<16x1xf32, #tpu.memory_space<vmem>>, vector<16x1xf32>,
    return
  }
  func.func @transform_0(%arg0: i32) -> (i32, i32) {
    %c0_i32 = arith.constant 0 : i32
    %c0_i32_0 = arith.constant 0 : i32
    return %arg0, %c0_i32 : i32, i32
  }
  func.func @transform_1(%arg0: i32) -> (i32, i32, i32) {
    %c0_i32 = arith.constant 0 : i32
    %c0_i32_0 = arith.constant 0 : i32
    %c0_i32_1 = arith.constant 0 : i32
    return %c0_i32, %arg0, %c0_i32_0 : i32, i32, i32
  }
  func.func @transform_2(%arg0: i32) -> (i32, i32) {
    %c0_i32 = arith.constant 0 : i32
    %c0_i32_0 = arith.constant 0 : i32
    %c0_i32_1 = arith.constant 0 : i32
    return %c0_i32, %c0_i32_0 : i32, i32
  }
  func.func @transform_3(%arg0: i32) -> (i32, i32) {
    %c0_i32 = arith.constant 0 : i32
    %c0_i32_0 = arith.constant 0 : i32
    %c0_i32_1 = arith.constant 0 : i32
    return %c0_i32, %c0_i32_0 : i32, i32
  }
  func.func @transform_4(%arg0: i32) -> (i32, i32) {
    %c0_i32 = arith.constant 0 : i32
    %c0_i32_0 = arith.constant 0 : i32
    %c0_i32_1 = arith.constant 0 : i32
    return %c0_i32, %c0_i32_0 : i32, i32
  }
  func.func @transform_5(%arg0: i32) -> (i32, i32) {
    %c0_i32 = arith.constant 0 : i32
    %c0_i32_0 = arith.constant 0 : i32
    %c0_i32_1 = arith.constant 0 : i32
    return %c0_i32, %c0_i32_0 : i32, i32
  }
  func.func @transform_6(%arg0: i32) -> (i32, i32) {
    %c0_i32 = arith.constant 0 : i32
    %c0_i32_0 = arith.constant 0 : i32
    %c0_i32_1 = arith.constant 0 : i32
    return %c0_i32, %c0_i32_0 : i32, i32
  }
  func.func @transform_7(%arg0: i32) -> (i32, i32) {
    %c0_i32 = arith.constant 0 : i32
    %c0_i32_0 = arith.constant 0 : i32
    %c0_i32_1 = arith.constant 0 : i32
    return %c0_i32, %c0_i32_0 : i32, i32
  }
  func.func @transform_8(%arg0: i32) -> (i32, i32) {
    %c0_i32 = arith.constant 0 : i32
    %c0_i32_0 = arith.constant 0 : i32
    return %arg0, %c0_i32 : i32, i32
  }
}

</mosaic_0001>

<llo_original>
// kernel: tpu_custom_call.1
$region0: #{tpu_custom_call.1}
  #allocation0 [shape = 'u32[]', space=smem, size = 0x4, offset = 0x4, fixed_abs, tag = 'smem constant byte address 0x4 - core index']
  #allocation1 [shape = 'u32[144,128]{1,0:T(1,128)}', space=vmem, size = 0x12000, scoped, tag = 'internal scratch']
  #allocation2 [shape = 'f32[1,1]{1,0:T(1,128)S(1)}', space=vmem, size = 0x200, scoped, tag = 'scoped memory for tpu_custom_call.1']
  #allocation10 [shape = 's32[]', space=sflag, size = 0x4, offset = 0, fixed_abs, tag = 'sflag constant byte address 0x0 - dummy sync flag']
  %s0 = inlined_call_operand.hbm [shape: f32[256,128], index: 0, kind: input, shape index: {}]
  %s1 = inlined_call_operand.hbm [shape: f32[3,256,128], index: 1, kind: input, shape index: {}]
  %s2 = inlined_call_operand.hbm [shape: f32[128,128], index: 2, kind: input, shape index: {}]
  %s3 = inlined_call_operand.vmem [shape: f32[1,128], index: 3, kind: input, shape index: {}]
  %s4 = inlined_call_operand.hbm [shape: f32[128,128], index: 4, kind: input, shape index: {}]
  %s5 = inlined_call_operand.vmem [shape: f32[1,128], index: 5, kind: input, shape index: {}]
  %s6 = inlined_call_operand.vmem [shape: f32[1,128], index: 6, kind: input, shape index: {}]
  %s7 = inlined_call_operand.<no memory space> [shape: f32[1,1], index: 7, kind: input, shape index: {}]
  %s8 = inlined_call_operand.vmem [shape: f32[32,1], index: 8, kind: output, shape index: {}]
  %s9 = sld [smem:[#allocation0]]
  $region81: #{tpu_custom_call.1} parent=0
    _
  %s11 = ssub.s32 1, %s9
  %s12 = scalar_select 0, %s11, %s9
  %v13 = vstv %s7
  %14 = vst [vmem:[#allocation2] sm:$0x1] %v13
  $region1: #{tpu_custom_call.1} parent=0
    #allocation3 [shape = 'u8[131072]{0}', space=vmem, size = 0x20000, scoped, tag = 'input window, operand 0']
    #allocation4 [shape = 's32[2]{0}', space=sflag, size = 0x8, scoped, tag = 'scoped memory for tpu_custom_call.1']
    #allocation5 [shape = 'u8[393216]{0}', space=vmem, size = 0x60000, scoped, tag = 'input window, operand 1']
    #allocation6 [shape = 's32[2]{0}', space=sflag, size = 0x8, scoped, tag = 'scoped memory for tpu_custom_call.1']
    #allocation7 [shape = 'u8[65536]{0}', space=vmem, size = 0x10000, scoped, tag = 'input window, operand 2, single buffered']
    #allocation8 [shape = 'u8[65536]{0}', space=vmem, size = 0x10000, scoped, tag = 'input window, operand 4, single buffered']
    #allocation9 [shape = 's32[1]{0}', space=sflag, size = 0x4, scoped, tag = 'scoped memory for tpu_custom_call.1']
    %15 = vsyncpa [#allocation4], 0
    %s16 = scalar_lea.sflag [#allocation4], 1
    %17 = vsyncpa %s16, 0
    %18 = vsyncpa [#allocation6], 0
    %s19 = scalar_lea.sflag [#allocation6], 1
    %20 = vsyncpa %s19, 0
    %21 = vsyncpa [#allocation9], 0
    loop: start=0, step=1, limit=4
    $region2: #{tpu_custom_call.1} parent=1 // loop_pre_header
      _
    $region3: #{tpu_custom_call.1} parent=1 // loop_header
      %s23 = sphi 0, %s27
      %p24 = scmp.ge.s32.totalorder %s23, 4
      %s33 = sphi 0, %s35
      %s36 = sphi 0, %s33
      %s37 = sphi 0, %s36
      %s53 = sphi 0, %s37
      %s59 = sphi 0, %s61
      %s62 = sphi 0, %s59
      %s63 = sphi 0, %s62
      %s79 = sphi 0, %s63
      %s83 = sphi 0, %s83
      %s85 = sphi 0, %s83
      %s86 = sphi 0, %s85
      %s100 = sphi 0, %s86
      %s104 = sphi 0, %s104
      %s106 = sphi 0, %s104
      %s107 = sphi 0, %s106
      %s121 = sphi 0, %s107
      %s125 = sphi 0, %s125
      %s127 = sphi 0, %s125
      %s128 = sphi 0, %s127
      %s142 = sphi 0, %s128
      %s146 = sphi 0, %s146
      %s148 = sphi 0, %s146
      %s149 = sphi 0, %s148
      %s163 = sphi 0, %s149
      %s167 = sphi 0, %s167
      %s169 = sphi 0, %s167
      %s170 = sphi 0, %s169
      %s184 = sphi 0, %s170
      %s188 = sphi 0, %s188
      %s190 = sphi 0, %s188
      %s191 = sphi 0, %s190
      %s205 = sphi 0, %s191
      %s211 = sphi 0, %s213
      %s214 = sphi 0, %s211
      %s215 = sphi 0, %s214
      %s231 = sphi 0, %s215
    $region4: #{tpu_custom_call.1} parent=1 // loop_header_branch
      %26 = sbr.rel (%p24) target = $region8
    $region5: #{tpu_custom_call.1} parent=1 // loop_body
      %s28 = ssub.s32 %s23, 1
      %s29 = ssub.s32 %s23, 2
      %s30 = sadd.s32 %s23, 1
      %s31 = ssub.s32 %s23, %s30
      %p32 = scmp.eq.s32.totalorder %s31, 0
      %s34 = sadd.s32 %s33, 1
      %s35 = scalar_select %p32, %s33, %s34
      %p38 = pneg %p32
      %p39 = scmp.eq.s32.totalorder %s23, 1
      %p40 = por %p38, %p39
      %p41 = scmp.ne.s32.totalorder %s33, %s36
      %p42 = scmp.eq.s32.totalorder %s23, 0
      %p43 = por %p41, %p42
      %p44 = scmp.ne.s32.totalorder %s33, %s36
      %p45 = scmp.eq.s32.totalorder %s28, 1
      %p46 = por %p44, %p45
      %p47 = scmp.ne.s32.totalorder %s36, %s37
      %p48 = scmp.eq.s32.totalorder %s28, 0
      %p49 = por %p47, %p48
      %p50 = scmp.ne.s32.totalorder %s36, %s37
      %p51 = scmp.eq.s32.totalorder %s29, 1
      %p52 = por %p50, %p51
      %p54 = scmp.ne.s32.totalorder %s37, %s53
      %p55 = scmp.eq.s32.totalorder %s29, 0
      %p56 = por %p54, %p55
      %s57 = ssub.s32 %s23, %s30
      %p58 = scmp.eq.s32.totalorder %s57, 0
      %s60 = sadd.s32 %s59, 1
      %s61 = scalar_select %p58, %s59, %s60
      %p64 = pneg %p58
      %p65 = scmp.eq.s32.totalorder %s23, 1
      %p66 = por %p64, %p65
      %p67 = scmp.ne.s32.totalorder %s59, %s62
      %p68 = scmp.eq.s32.totalorder %s23, 0
      %p69 = por %p67, %p68
      %p70 = scmp.ne.s32.totalorder %s59, %s62
      %p71 = scmp.eq.s32.totalorder %s28, 1
      %p72 = por %p70, %p71
      %p73 = scmp.ne.s32.totalorder %s62, %s63
      %p74 = scmp.eq.s32.totalorder %s28, 0
      %p75 = por %p73, %p74
      %p76 = scmp.ne.s32.totalorder %s62, %s63
      %p77 = scmp.eq.s32.totalorder %s29, 1
      %p78 = por %p76, %p77
      %p80 = scmp.ne.s32.totalorder %s63, %s79
      %p81 = scmp.eq.s32.totalorder %s29, 0
      %p82 = por %p80, %p81
      %s84 = sadd.s32 %s83, 1
      %p87 = scmp.eq.s32.totalorder %s23, 1
      %p88 = scmp.ne.s32.totalorder %s83, %s85
      %p89 = scmp.eq.s32.totalorder %s23, 0
      %p90 = por %p88, %p89
      %p91 = scmp.ne.s32.totalorder %s83, %s85
      %p92 = scmp.eq.s32.totalorder %s28, 1
      %p93 = por %p91, %p92
      %p94 = scmp.ne.s32.totalorder %s85, %s86
      %p95 = scmp.eq.s32.totalorder %s28, 0
      %p96 = por %p94, %p95
      %p97 = scmp.ne.s32.totalorder %s85, %s86
      %p98 = scmp.eq.s32.totalorder %s29, 1
      %p99 = por %p97, %p98
      %p101 = scmp.ne.s32.totalorder %s86, %s100
      %p102 = scmp.eq.s32.totalorder %s29, 0
      %p103 = por %p101, %p102
      %s105 = sadd.s32 %s104, 1
      %p108 = scmp.eq.s32.totalorder %s23, 1
      %p109 = scmp.ne.s32.totalorder %s104, %s106
      %p110 = scmp.eq.s32.totalorder %s23, 0
      %p111 = por %p109, %p110
      %p112 = scmp.ne.s32.totalorder %s104, %s106
      %p113 = scmp.eq.s32.totalorder %s28, 1
      %p114 = por %p112, %p113
      %p115 = scmp.ne.s32.totalorder %s106, %s107
      %p116 = scmp.eq.s32.totalorder %s28, 0
      %p117 = por %p115, %p116
      %p118 = scmp.ne.s32.totalorder %s106, %s107
      %p119 = scmp.eq.s32.totalorder %s29, 1
      %p120 = por %p118, %p119
      %p122 = scmp.ne.s32.totalorder %s107, %s121
      %p123 = scmp.eq.s32.totalorder %s29, 0
      %p124 = por %p122, %p123
      %s126 = sadd.s32 %s125, 1
      %p129 = scmp.eq.s32.totalorder %s23, 1
      %p130 = scmp.ne.s32.totalorder %s125, %s127
      %p131 = scmp.eq.s32.totalorder %s23, 0
      %p132 = por %p130, %p131
      %p133 = scmp.ne.s32.totalorder %s125, %s127
      %p134 = scmp.eq.s32.totalorder %s28, 1
      %p135 = por %p133, %p134
      %p136 = scmp.ne.s32.totalorder %s127, %s128
      %p137 = scmp.eq.s32.totalorder %s28, 0
      %p138 = por %p136, %p137
      %p139 = scmp.ne.s32.totalorder %s127, %s128
      %p140 = scmp.eq.s32.totalorder %s29, 1
      %p141 = por %p139, %p140
      %p143 = scmp.ne.s32.totalorder %s128, %s142
      %p144 = scmp.eq.s32.totalorder %s29, 0
      %p145 = por %p143, %p144
      %s147 = sadd.s32 %s146, 1
      %p150 = scmp.eq.s32.totalorder %s23, 1
      %p151 = scmp.ne.s32.totalorder %s146, %s148
      %p152 = scmp.eq.s32.totalorder %s23, 0
      %p153 = por %p151, %p152
      %p154 = scmp.ne.s32.totalorder %s146, %s148
      %p155 = scmp.eq.s32.totalorder %s28, 1
      %p156 = por %p154, %p155
      %p157 = scmp.ne.s32.totalorder %s148, %s149
      %p158 = scmp.eq.s32.totalorder %s28, 0
      %p159 = por %p157, %p158
      %p160 = scmp.ne.s32.totalorder %s148, %s149
      %p161 = scmp.eq.s32.totalorder %s29, 1
      %p162 = por %p160, %p161
      %p164 = scmp.ne.s32.totalorder %s149, %s163
      %p165 = scmp.eq.s32.totalorder %s29, 0
      %p166 = por %p164, %p165
      %s168 = sadd.s32 %s167, 1
      %p171 = scmp.eq.s32.totalorder %s23, 1
      %p172 = scmp.ne.s32.totalorder %s167, %s169
      %p173 = scmp.eq.s32.totalorder %s23, 0
      %p174 = por %p172, %p173
      %p175 = scmp.ne.s32.totalorder %s167, %s169
      %p176 = scmp.eq.s32.totalorder %s28, 1
      %p177 = por %p175, %p176
      %p178 = scmp.ne.s32.totalorder %s169, %s170
      %p179 = scmp.eq.s32.totalorder %s28, 0
      %p180 = por %p178, %p179
      %p181 = scmp.ne.s32.totalorder %s169, %s170
      %p182 = scmp.eq.s32.totalorder %s29, 1
      %p183 = por %p181, %p182
      %p185 = scmp.ne.s32.totalorder %s170, %s184
      %p186 = scmp.eq.s32.totalorder %s29, 0
      %p187 = por %p185, %p186
      %s189 = sadd.s32 %s188, 1
      %p192 = scmp.eq.s32.totalorder %s23, 1
      %p193 = scmp.ne.s32.totalorder %s188, %s190
      %p194 = scmp.eq.s32.totalorder %s23, 0
      %p195 = por %p193, %p194
      %p196 = scmp.ne.s32.totalorder %s188, %s190
      %p197 = scmp.eq.s32.totalorder %s28, 1
      %p198 = por %p196, %p197
      %p199 = scmp.ne.s32.totalorder %s190, %s191
      %p200 = scmp.eq.s32.totalorder %s28, 0
      %p201 = por %p199, %p200
      %p202 = scmp.ne.s32.totalorder %s190, %s191
      %p203 = scmp.eq.s32.totalorder %s29, 1
      %p204 = por %p202, %p203
      %p206 = scmp.ne.s32.totalorder %s191, %s205
      %p207 = scmp.eq.s32.totalorder %s29, 0
      %p208 = por %p206, %p207
      %s209 = ssub.s32 %s23, %s30
      %p210 = scmp.eq.s32.totalorder %s209, 0
      %s212 = sadd.s32 %s211, 1
      %s213 = scalar_select %p210, %s211, %s212
      %p216 = pneg %p210
      %p217 = scmp.eq.s32.totalorder %s23, 1
      %p218 = por %p216, %p217
      %p219 = scmp.ne.s32.totalorder %s211, %s214
      %p220 = scmp.eq.s32.totalorder %s23, 0
      %p221 = por %p219, %p220
      %p222 = scmp.ne.s32.totalorder %s211, %s214
      %p223 = scmp.eq.s32.totalorder %s28, 1
      %p224 = por %p222, %p223
      %p225 = scmp.ne.s32.totalorder %s214, %s215
      %p226 = scmp.eq.s32.totalorder %s28, 0
      %p227 = por %p225, %p226
      %p228 = scmp.ne.s32.totalorder %s214, %s215
      %p229 = scmp.eq.s32.totalorder %s29, 1
      %p230 = por %p228, %p229
      %p232 = scmp.ne.s32.totalorder %s215, %s231
      %p233 = scmp.eq.s32.totalorder %s29, 0
      %p234 = por %p232, %p233
      %p235 = scmp.le.s32.totalorder 1, %s23
      %p236 = scmp.lt.s32.totalorder %s23, 3
      %p237 = pnand %p235, %p236
      %p238 = pneg %p237
      // Predicated region
      $region9: #{tpu_custom_call.1} parent=5 // pred_check
        _
      $region10: #{tpu_custom_call.1} parent=5 // pred_check_branch
        %240 = sbr.rel (%p237) target = $region12
      $region11: #{tpu_custom_call.1} parent=5 // pred_region
        %s241 = ssub.s32 %s23, 1
        // Predicated region
        $region13: #{tpu_custom_call.1} parent=11 // pred_check
          %p242 = pneg %p96
        $region14: #{tpu_custom_call.1} parent=11 // pred_check_branch
          %244 = sbr.rel (%p242) target = $region16
        $region15: #{tpu_custom_call.1} parent=11 // pred_region
          %s246 = ssub.s32 2048, 2048
          %247 = vsyncadd [#allocation6], %s246
          %s248 = sshll.u32 [#allocation7], 4
          %s249 = int_to_ptr.vmem [resolvable:$true] %s248
          %254 = dma.hbm_to_vmem [thread:$0]  %s2, 2048, %s249, [#allocation6], 128, 128, 8
        $region16: #{tpu_custom_call.1} parent=11 // pred_fallthru
          _
        // Predicated region
        $region17: #{tpu_custom_call.1} parent=11 // pred_check
          %p255 = pneg %p117
        $region18: #{tpu_custom_call.1} parent=11 // pred_check_branch
          %257 = sbr.rel (%p255) target = $region20
        $region19: #{tpu_custom_call.1} parent=11 // pred_region
          _
        $region20: #{tpu_custom_call.1} parent=11 // pred_fallthru
          _
        // Predicated region
        $region21: #{tpu_custom_call.1} parent=11 // pred_check
          %p258 = pneg %p138
        $region22: #{tpu_custom_call.1} parent=11 // pred_check_branch
          %260 = sbr.rel (%p258) target = $region24
        $region23: #{tpu_custom_call.1} parent=11 // pred_region
          %s262 = ssub.s32 2048, 2048
          %263 = vsyncadd [#allocation9], %s262
          %s264 = sshll.u32 [#allocation8], 4
          %s265 = int_to_ptr.vmem [resolvable:$true] %s264
          %270 = dma.hbm_to_vmem [thread:$0]  %s4, 2048, %s265, [#allocation9], 128, 128, 8
        $region24: #{tpu_custom_call.1} parent=11 // pred_fallthru
          _
        // Predicated region
        $region25: #{tpu_custom_call.1} parent=11 // pred_check
          %p271 = pneg %p159
        $region26: #{tpu_custom_call.1} parent=11 // pred_check_branch
          %273 = sbr.rel (%p271) target = $region28
        $region27: #{tpu_custom_call.1} parent=11 // pred_region
          _
        $region28: #{tpu_custom_call.1} parent=11 // pred_fallthru
          _
        // Predicated region
        $region29: #{tpu_custom_call.1} parent=11 // pred_check
          %p274 = pneg %p180
        $region30: #{tpu_custom_call.1} parent=11 // pred_check_branch
          %276 = sbr.rel (%p274) target = $region32
        $region31: #{tpu_custom_call.1} parent=11 // pred_region
          _
        $region32: #{tpu_custom_call.1} parent=11 // pred_fallthru
          _
        // Predicated region
        $region33: #{tpu_custom_call.1} parent=11 // pred_check
          %p277 = pneg %p201
        $region34: #{tpu_custom_call.1} parent=11 // pred_check_branch
          %279 = sbr.rel (%p277) target = $region36
        $region35: #{tpu_custom_call.1} parent=11 // pred_region
          _
        $region36: #{tpu_custom_call.1} parent=11 // pred_fallthru
          _
      $region12: #{tpu_custom_call.1} parent=5 // pred_fallthru
        _
      %p280 = scmp.lt.s32.totalorder %s23, 2
      // Predicated region
      $region37: #{tpu_custom_call.1} parent=5 // pred_check
        %p281 = pneg %p280
      $region38: #{tpu_custom_call.1} parent=5 // pred_check_branch
        %283 = sbr.rel (%p281) target = $region40
      $region39: #{tpu_custom_call.1} parent=5 // pred_region
        // Predicated region
        $region41: #{tpu_custom_call.1} parent=39 // pred_check
          %p284 = pneg %p43
        $region42: #{tpu_custom_call.1} parent=39 // pred_check_branch
          %286 = sbr.rel (%p284) target = $region44
        $region43: #{tpu_custom_call.1} parent=39 // pred_region
          %s287 = sand.u32 %s33, 1
          %s288 = scalar_lea.sflag [#allocation4], %s287
          %s289 = sand.u32 %s33, 1
          %s290 = smul.addr %s289, 128
          %s291 = scalar_lea.vmem [#allocation3], %s290
          %s292 = smul.u32 16, %s23
          %s294 = ssub.s32 2048, 2048
          %295 = vsyncadd %s288, %s294
          %s296 = smul.addr %s292, 128
          %s297 = scalar_lea.hbm %s0, %s296
          %s298 = sshll.u32 %s291, 4
          %s299 = int_to_ptr.vmem [resolvable:$true] %s298
          %304 = dma.hbm_to_vmem [thread:$0]  %s297, 2048, %s299, %s288, 128, 128, 8
        $region44: #{tpu_custom_call.1} parent=39 // pred_fallthru
          _
        // Predicated region
        $region45: #{tpu_custom_call.1} parent=39 // pred_check
          %p305 = pneg %p69
        $region46: #{tpu_custom_call.1} parent=39 // pred_check_branch
          %307 = sbr.rel (%p305) target = $region48
        $region47: #{tpu_custom_call.1} parent=39 // pred_region
          #allocation11 [shape = 'u32[6]{0}', space=smem, size = 0x18, scoped, tag = 'DMA stride descriptor']
          %s308 = sand.u32 %s23, 1
          %s309 = scalar_lea.sflag [#allocation6], %s308
          %s310 = sand.u32 %s59, 1
          %s311 = smul.addr %s310, 384
          %s312 = scalar_lea.vmem [#allocation5], %s311
          %s313 = smul.u32 16, %s23
          %s315 = ssub.s32 6144, 6144
          %316 = vsyncadd %s309, %s315
          %s317 = smul.addr %s313, 128
          %s318 = scalar_lea.hbm %s1, %s317
          %s320 = sshll.u32 1, 14
          %s321 = sxor.u32 4294967295, %s320
          %s323 = sld [smem:[#allocation0]]
          %s324 = sadd.s32 2, %s323
          %s326 = sshll.u32 7, 26
          %s327 = sxor.u32 4294967295, %s326
          %s328 = sand.u32 0, %s327
          %s329 = sshll.u32 %s324, 26
          %s330 = sor.u32 %s328, %s329
          %s331 = sshll.u32 %s312, 4
          %s332 = int_to_ptr.vmem [resolvable:$true] %s331
          %338 = sst [smem:[#allocation11]] 4096
          %s339 = scalar_lea.smem [#allocation11], 1
          %340 = sst [smem:[%s339]] 2048
          %s341 = scalar_lea.smem [#allocation11], 2
          %342 = sst [smem:[%s341]] 16
          %s343 = scalar_lea.smem [#allocation11], 3
          %344 = sst [smem:[%s343]] 128
          %s345 = scalar_lea.smem [#allocation11], 4
          %346 = sst [smem:[%s345]] 128
          %s347 = scalar_lea.smem [#allocation11], 5
          %348 = sst [smem:[%s347]] 8
          %350 = dma.general %s318, 6144, %s332, %s309, [#allocation10], [#allocation11], %s330, 0
        $region48: #{tpu_custom_call.1} parent=39 // pred_fallthru
          _
      $region40: #{tpu_custom_call.1} parent=5 // pred_fallthru
        _
      %p351 = scmp.le.s32.totalorder 1, %s23
      %p352 = scmp.lt.s32.totalorder %s23, 3
      %p353 = pnand %p351, %p352
      %p354 = pneg %p353
      // Predicated region
      $region49: #{tpu_custom_call.1} parent=5 // pred_check
        _
      $region50: #{tpu_custom_call.1} parent=5 // pred_check_branch
        %356 = sbr.rel (%p353) target = $region52
      $region51: #{tpu_custom_call.1} parent=5 // pred_region
        %s357 = ssub.s32 %s23, 1
        %s358 = sand.u32 %s36, 1
        %s359 = scalar_lea.sflag [#allocation4], %s358
        %s360 = sand.u32 %s36, 1
        %s361 = smul.addr %s360, 128
        %s362 = scalar_lea.vmem [#allocation3], %s361
        // Predicated region
        $region53: #{tpu_custom_call.1} parent=51 // pred_check
          %p363 = pneg %p49
        $region54: #{tpu_custom_call.1} parent=51 // pred_check_branch
          %365 = sbr.rel (%p363) target = $region56
        $region55: #{tpu_custom_call.1} parent=51 // pred_region
          %366 = dma.done %s359, 2048
        $region56: #{tpu_custom_call.1} parent=51 // pred_fallthru
          _
        %s367 = sand.u32 %s28, 1
        %s368 = scalar_lea.sflag [#allocation6], %s367
        %s369 = sand.u32 %s62, 1
        %s370 = smul.addr %s369, 384
        %s371 = scalar_lea.vmem [#allocation5], %s370
        // Predicated region
        $region57: #{tpu_custom_call.1} parent=51 // pred_check
          %p372 = pneg %p75
        $region58: #{tpu_custom_call.1} parent=51 // pred_check_branch
          %374 = sbr.rel (%p372) target = $region60
        $region59: #{tpu_custom_call.1} parent=51 // pred_region
          %375 = dma.done %s368, 6144
        $region60: #{tpu_custom_call.1} parent=51 // pred_fallthru
          _
        // Predicated region
        $region61: #{tpu_custom_call.1} parent=51 // pred_check
          %p376 = pneg %p96
        $region62: #{tpu_custom_call.1} parent=51 // pred_check_branch
          %378 = sbr.rel (%p376) target = $region64
        $region63: #{tpu_custom_call.1} parent=51 // pred_region
          %379 = dma.done [#allocation6], 2048
        $region64: #{tpu_custom_call.1} parent=51 // pred_fallthru
          _
        // Predicated region
        $region65: #{tpu_custom_call.1} parent=51 // pred_check
          %p380 = pneg %p138
        $region66: #{tpu_custom_call.1} parent=51 // pred_check_branch
          %382 = sbr.rel (%p380) target = $region68
        $region67: #{tpu_custom_call.1} parent=51 // pred_region
          %383 = dma.done [#allocation9], 2048
        $region68: #{tpu_custom_call.1} parent=51 // pred_fallthru
          _
        %s384 = sand.u32 %s36, 1
        %s385 = scalar_lea.sflag [#allocation4], %s384
        %s386 = sand.u32 %s36, 1
        %s387 = smul.addr %s386, 128
        %s388 = scalar_lea.vmem [#allocation3], %s387
        %p389 = pneg %p49
        %p390 = pneg %p46
        %s391 = sand.u32 %s28, 1
        %s392 = scalar_lea.sflag [#allocation6], %s391
        %s393 = sand.u32 %s62, 1
        %s394 = smul.addr %s393, 384
        %s395 = scalar_lea.vmem [#allocation5], %s394
        %p396 = pneg %p75
        %p397 = pneg %p72
        %p398 = pneg %p96
        %p399 = pneg %p93
        %p400 = pneg %p117
        %p401 = pneg %p114
        %p402 = pneg %p138
        %p403 = pneg %p135
        %p404 = pneg %p159
        %p405 = pneg %p156
        %p406 = pneg %p180
        %p407 = pneg %p177
        %p408 = pneg %p201
        %p409 = pneg %p198
        %p410 = pneg %p227
        %p411 = pneg %p224
        %s412 = smul.u32 2, %s28
        %p413 = scmp.lt.s32.totalorder %s412, 3
        %s414 = scalar_select %p413, %s412, 3
        %s415 = smul.addr %s414, 8
        %s416 = scalar_lea.vmem %s8, %s415
        %s417 = smul.u32 16, %s28
        %s418 = smul.u32 16, %s28
        %s419 = smul.u32 2, %s28
        %p420 = scmp.lt.s32.totalorder %s419, 3
        %s421 = scalar_select %p420, %s419, 3
        %s422 = smul.addr %s421, 8
        %s423 = scalar_lea.vmem %s8, %s422
        %s424 = smul.u32 2, %s28
        %v425 = vld [vmem:[%s362] sm:$0xff]
        %v426 = vld [vmem:[%s362 + $0x8] sm:$0xff]
        %v427 = vld [vmem:[%s362 + $0x10] sm:$0xff]
        %v428 = vld [vmem:[%s362 + $0x18] sm:$0xff]
        %v429 = vld [vmem:[%s362 + $0x20] sm:$0xff]
        %v430 = vld [vmem:[%s362 + $0x28] sm:$0xff]
        %v431 = vld [vmem:[%s362 + $0x30] sm:$0xff]
        %v432 = vld [vmem:[%s362 + $0x38] sm:$0xff]
        %v433 = vld [vmem:[%s362 + $0x40] sm:$0xff]
        %v434 = vld [vmem:[%s362 + $0x48] sm:$0xff]
        %v435 = vld [vmem:[%s362 + $0x50] sm:$0xff]
        %v436 = vld [vmem:[%s362 + $0x58] sm:$0xff]
        %v437 = vld [vmem:[%s362 + $0x60] sm:$0xff]
        %v438 = vld [vmem:[%s362 + $0x68] sm:$0xff]
        %v439 = vld [vmem:[%s362 + $0x70] sm:$0xff]
        %v440 = vld [vmem:[%s362 + $0x78] sm:$0xff]
        %v441 = vld [vmem:[#allocation7] sm:$0xff]
        %v442 = vld [vmem:[#allocation7 + $0x8] sm:$0xff]
        %v443 = vld [vmem:[#allocation7 + $0x10] sm:$0xff]
        %v444 = vld [vmem:[#allocation7 + $0x18] sm:$0xff]
        %v445 = vld [vmem:[#allocation7 + $0x20] sm:$0xff]
        %v446 = vld [vmem:[#allocation7 + $0x28] sm:$0xff]
        %v447 = vld [vmem:[#allocation7 + $0x30] sm:$0xff]
        %v448 = vld [vmem:[#allocation7 + $0x38] sm:$0xff]
        %v449 = vld [vmem:[#allocation7 + $0x40] sm:$0xff]
        %v450 = vld [vmem:[#allocation7 + $0x48] sm:$0xff]
        %v451 = vld [vmem:[#allocation7 + $0x50] sm:$0xff]
        %v452 = vld [vmem:[#allocation7 + $0x58] sm:$0xff]
        %v453 = vld [vmem:[#allocation7 + $0x60] sm:$0xff]
        %v454 = vld [vmem:[#allocation7 + $0x68] sm:$0xff]
        %v455 = vld [vmem:[#allocation7 + $0x70] sm:$0xff]
        %v456 = vld [vmem:[#allocation7 + $0x78] sm:$0xff]
        %v457 = vld [vmem:[%s3] sm:$0x1]
        %v459 = vlaneseq
        %v460 = vshrl.u32 %v459, 7
        %v461 = vsub.s32 0, %v460
        %v462 = vrot.slane %v457, %v461
        %464 = vmatprep.subr.mxu0 0.0
        %465 = vmatpush1.msra.mxu0 %v441
        %466 = vmatprep.subr.mxu0 0.0
        %467 = vmatpush1.msra.mxu0 %v442
        %468 = vmatprep.subr.mxu0 0.0
        %469 = vmatpush1.msra.mxu0 %v443
        %470 = vmatprep.subr.mxu0 0.0
        %471 = vmatpush1.msra.mxu0 %v444
        %472 = vmatprep.subr.mxu0 0.0
        %473 = vmatpush1.msra.mxu0 %v445
        %474 = vmatprep.subr.mxu0 0.0
        %475 = vmatpush1.msra.mxu0 %v446
        %476 = vmatprep.subr.mxu0 0.0
        %477 = vmatpush1.msra.mxu0 %v447
        %478 = vmatprep.subr.mxu0 0.0
        %479 = vmatpush1.msra.mxu0 %v448
        %480 = vmatprep.subr.mxu0 0.0
        %481 = vmatpush1.msra.mxu0 %v449
        %482 = vmatprep.subr.mxu0 0.0
        %483 = vmatpush1.msra.mxu0 %v450
        %484 = vmatprep.subr.mxu0 0.0
        %485 = vmatpush1.msra.mxu0 %v451
        %486 = vmatprep.subr.mxu0 0.0
        %487 = vmatpush1.msra.mxu0 %v452
        %488 = vmatprep.subr.mxu0 0.0
        %489 = vmatpush1.msra.mxu0 %v453
        %490 = vmatprep.subr.mxu0 0.0
        %491 = vmatpush1.msra.mxu0 %v454
        %492 = vmatprep.subr.mxu0 0.0
        %493 = vmatpush1.msra.mxu0 %v455
        %494 = vmatprep.subr.mxu0 0.0
        %495 = vmatpush1.msra.mxu0 %v456
        %496 = vmatprep.subr.mxu0 0.0
        %497 = vmatpush1.msra.mxu0 0.0
        %498 = vmatprep.subr.mxu0 0.0
        %499 = vmatpush1.msra.mxu0 0.0
        %500 = vmatprep.subr.mxu0 0.0
        %501 = vmatpush1.msra.mxu0 0.0
        %502 = vmatprep.subr.mxu0 0.0
        %503 = vmatpush1.msra.mxu0 0.0
        %504 = vmatprep.subr.mxu0 0.0
        %505 = vmatpush1.msra.mxu0 0.0
        %506 = vmatprep.subr.mxu0 0.0
        %507 = vmatpush1.msra.mxu0 0.0
        %508 = vmatprep.subr.mxu0 0.0
        %509 = vmatpush1.msra.mxu0 0.0
        %510 = vmatprep.subr.mxu0 0.0
        %511 = vmatpush1.msra.mxu0 0.0
        %512 = vmatprep.subr.mxu0 0.0
        %513 = vmatpush1.msra.mxu0 0.0
        %514 = vmatprep.subr.mxu0 0.0
        %515 = vmatpush1.msra.mxu0 0.0
        %516 = vmatprep.subr.mxu0 0.0
        %517 = vmatpush1.msra.mxu0 0.0
        %518 = vmatprep.subr.mxu0 0.0
        %519 = vmatpush1.msra.mxu0 0.0
        %520 = vmatprep.subr.mxu0 0.0
        %521 = vmatpush1.msra.mxu0 0.0
        %522 = vmatprep.subr.mxu0 0.0
        %523 = vmatpush1.msra.mxu0 0.0
        %524 = vmatprep.subr.mxu0 0.0
        %525 = vmatpush1.msra.mxu0 0.0
        %526 = vmatprep.subr.mxu0 0.0
        %527 = vmatpush1.msra.mxu0 0.0
        %528 = vmatprep.mubr.f32.mxu0 0.0
        %529 = vmatmul.mubr.f32.gmra.mrb[0].mxu0 %v425
        %v530 = vpop.f32.mrb[0].mxu0
        %v531 = vadd.f32 %v462, %v530
        %v532 = vpop.f32.mrb[0].mxu0
        %533 = vmatprep.mubr.f32.mxu0 0.0
        %534 = vmatmul.mubr.f32.gmra.mrb[0].mxu0 %v426
        %v535 = vpop.f32.mrb[0].mxu0
        %v536 = vadd.f32 %v462, %v535
        %v537 = vpop.f32.mrb[0].mxu0
        %538 = vmatprep.mubr.f32.mxu0 0.0
        %539 = vmatmul.mubr.f32.gmra.mrb[0].mxu0 %v427
        %v540 = vpop.f32.mrb[0].mxu0
        %v541 = vadd.f32 %v462, %v540
        %v542 = vpop.f32.mrb[0].mxu0
        %543 = vmatprep.mubr.f32.mxu0 0.0
        %544 = vmatmul.mubr.f32.gmra.mrb[0].mxu0 %v428
        %v545 = vpop.f32.mrb[0].mxu0
        %v546 = vadd.f32 %v462, %v545
        %v547 = vpop.f32.mrb[0].mxu0
        %548 = vmatprep.mubr.f32.mxu0 0.0
        %549 = vmatmul.mubr.f32.gmra.mrb[0].mxu0 %v429
        %v550 = vpop.f32.mrb[0].mxu0
        %v551 = vadd.f32 %v462, %v550
        %v552 = vpop.f32.mrb[0].mxu0
        %553 = vmatprep.mubr.f32.mxu0 0.0
        %554 = vmatmul.mubr.f32.gmra.mrb[0].mxu0 %v430
        %v555 = vpop.f32.mrb[0].mxu0
        %v556 = vadd.f32 %v462, %v555
        %v557 = vpop.f32.mrb[0].mxu0
        %558 = vmatprep.mubr.f32.mxu0 0.0
        %559 = vmatmul.mubr.f32.gmra.mrb[0].mxu0 %v431
        %v560 = vpop.f32.mrb[0].mxu0
        %v561 = vadd.f32 %v462, %v560
        %v562 = vpop.f32.mrb[0].mxu0
        %563 = vmatprep.mubr.f32.mxu0 0.0
        %564 = vmatmul.mubr.f32.gmra.mrb[0].mxu0 %v432
        %v565 = vpop.f32.mrb[0].mxu0
        %v566 = vadd.f32 %v462, %v565
        %v567 = vpop.f32.mrb[0].mxu0
        %568 = vmatprep.mubr.f32.mxu0 0.0
        %569 = vmatmul.mubr.f32.gmra.mrb[0].mxu0 %v433
        %v570 = vpop.f32.mrb[0].mxu0
        %v571 = vadd.f32 %v462, %v570
        %v572 = vpop.f32.mrb[0].mxu0
        %573 = vmatprep.mubr.f32.mxu0 0.0
        %574 = vmatmul.mubr.f32.gmra.mrb[0].mxu0 %v434
        %v575 = vpop.f32.mrb[0].mxu0
        %v576 = vadd.f32 %v462, %v575
        %v577 = vpop.f32.mrb[0].mxu0
        %578 = vmatprep.mubr.f32.mxu0 0.0
        %579 = vmatmul.mubr.f32.gmra.mrb[0].mxu0 %v435
        %v580 = vpop.f32.mrb[0].mxu0
        %v581 = vadd.f32 %v462, %v580
        %v582 = vpop.f32.mrb[0].mxu0
        %583 = vmatprep.mubr.f32.mxu0 0.0
        %584 = vmatmul.mubr.f32.gmra.mrb[0].mxu0 %v436
        %v585 = vpop.f32.mrb[0].mxu0
        %v586 = vadd.f32 %v462, %v585
        %v587 = vpop.f32.mrb[0].mxu0
        %588 = vmatprep.mubr.f32.mxu0 0.0
        %589 = vmatmul.mubr.f32.gmra.mrb[0].mxu0 %v437
        %v590 = vpop.f32.mrb[0].mxu0
        %v591 = vadd.f32 %v462, %v590
        %v592 = vpop.f32.mrb[0].mxu0
        %593 = vmatprep.mubr.f32.mxu0 0.0
        %594 = vmatmul.mubr.f32.gmra.mrb[0].mxu0 %v438
        %v595 = vpop.f32.mrb[0].mxu0
        %v596 = vadd.f32 %v462, %v595
        %v597 = vpop.f32.mrb[0].mxu0
        %598 = vmatprep.mubr.f32.mxu0 0.0
        %599 = vmatmul.mubr.f32.gmra.mrb[0].mxu0 %v439
        %v600 = vpop.f32.mrb[0].mxu0
        %v601 = vadd.f32 %v462, %v600
        %v602 = vpop.f32.mrb[0].mxu0
        %603 = vmatprep.mubr.f32.mxu0 0.0
        %604 = vmatmul.mubr.f32.gmra.mrb[0].mxu0 %v440
        %v605 = vpop.f32.mrb[0].mxu0
        %v606 = vadd.f32 %v462, %v605
        %v607 = vpop.f32.mrb[0].mxu0
        %608 = vdwg.mxu0
        %v609 = vmax.f32 %v531, 0.0
        %v610 = vmax.f32 %v536, 0.0
        %v611 = vmax.f32 %v541, 0.0
        %v612 = vmax.f32 %v546, 0.0
        %v613 = vmax.f32 %v551, 0.0
        %v614 = vmax.f32 %v556, 0.0
        %v615 = vmax.f32 %v561, 0.0
        %v616 = vmax.f32 %v566, 0.0
        %v617 = vmax.f32 %v571, 0.0
        %v618 = vmax.f32 %v576, 0.0
        %v619 = vmax.f32 %v581, 0.0
        %v620 = vmax.f32 %v586, 0.0
        %v621 = vmax.f32 %v591, 0.0
        %v622 = vmax.f32 %v596, 0.0
        %v623 = vmax.f32 %v601, 0.0
        %v624 = vmax.f32 %v606, 0.0
        %v625 = vld [vmem:[#allocation8] sm:$0xff]
        %v626 = vld [vmem:[#allocation8 + $0x8] sm:$0xff]
        %v627 = vld [vmem:[#allocation8 + $0x10] sm:$0xff]
        %v628 = vld [vmem:[#allocation8 + $0x18] sm:$0xff]
        %v629 = vld [vmem:[#allocation8 + $0x20] sm:$0xff]
        %v630 = vld [vmem:[#allocation8 + $0x28] sm:$0xff]
        %v631 = vld [vmem:[#allocation8 + $0x30] sm:$0xff]
        %v632 = vld [vmem:[#allocation8 + $0x38] sm:$0xff]
        %v633 = vld [vmem:[#allocation8 + $0x40] sm:$0xff]
        %v634 = vld [vmem:[#allocation8 + $0x48] sm:$0xff]
        %v635 = vld [vmem:[#allocation8 + $0x50] sm:$0xff]
        %v636 = vld [vmem:[#allocation8 + $0x58] sm:$0xff]
        %v637 = vld [vmem:[#allocation8 + $0x60] sm:$0xff]
        %v638 = vld [vmem:[#allocation8 + $0x68] sm:$0xff]
        %v639 = vld [vmem:[#allocation8 + $0x70] sm:$0xff]
        %v640 = vld [vmem:[#allocation8 + $0x78] sm:$0xff]
        %v641 = vld [vmem:[%s5] sm:$0x1]
        %v643 = vlaneseq
        %v644 = vshrl.u32 %v643, 7
        %v645 = vsub.s32 0, %v644
        %v646 = vrot.slane %v641, %v645
        %648 = vmatprep.subr.mxu0 0.0
        %649 = vmatpush1.msra.mxu0 %v625
        %650 = vmatprep.subr.mxu0 0.0
        %651 = vmatpush1.msra.mxu0 %v626
        %652 = vmatprep.subr.mxu0 0.0
        %653 = vmatpush1.msra.mxu0 %v627
        %654 = vmatprep.subr.mxu0 0.0
        %655 = vmatpush1.msra.mxu0 %v628
        %656 = vmatprep.subr.mxu0 0.0
        %657 = vmatpush1.msra.mxu0 %v629
        %658 = vmatprep.subr.mxu0 0.0
        %659 = vmatpush1.msra.mxu0 %v630
        %660 = vmatprep.subr.mxu0 0.0
        %661 = vmatpush1.msra.mxu0 %v631
        %662 = vmatprep.subr.mxu0 0.0
        %663 = vmatpush1.msra.mxu0 %v632
        %664 = vmatprep.subr.mxu0 0.0
        %665 = vmatpush1.msra.mxu0 %v633
        %666 = vmatprep.subr.mxu0 0.0
        %667 = vmatpush1.msra.mxu0 %v634
        %668 = vmatprep.subr.mxu0 0.0
        %669 = vmatpush1.msra.mxu0 %v635
        %670 = vmatprep.subr.mxu0 0.0
        %671 = vmatpush1.msra.mxu0 %v636
        %672 = vmatprep.subr.mxu0 0.0
        %673 = vmatpush1.msra.mxu0 %v637
        %674 = vmatprep.subr.mxu0 0.0
        %675 = vmatpush1.msra.mxu0 %v638
        %676 = vmatprep.subr.mxu0 0.0
        %677 = vmatpush1.msra.mxu0 %v639
        %678 = vmatprep.subr.mxu0 0.0
        %679 = vmatpush1.msra.mxu0 %v640
        %680 = vmatprep.subr.mxu0 0.0
        %681 = vmatpush1.msra.mxu0 0.0
        %682 = vmatprep.subr.mxu0 0.0
        %683 = vmatpush1.msra.mxu0 0.0
        %684 = vmatprep.subr.mxu0 0.0
        %685 = vmatpush1.msra.mxu0 0.0
        %686 = vmatprep.subr.mxu0 0.0
        %687 = vmatpush1.msra.mxu0 0.0
        %688 = vmatprep.subr.mxu0 0.0
        %689 = vmatpush1.msra.mxu0 0.0
        %690 = vmatprep.subr.mxu0 0.0
        %691 = vmatpush1.msra.mxu0 0.0
        %692 = vmatprep.subr.mxu0 0.0
        %693 = vmatpush1.msra.mxu0 0.0
        %694 = vmatprep.subr.mxu0 0.0
        %695 = vmatpush1.msra.mxu0 0.0
        %696 = vmatprep.subr.mxu0 0.0
        %697 = vmatpush1.msra.mxu0 0.0
        %698 = vmatprep.subr.mxu0 0.0
        %699 = vmatpush1.msra.mxu0 0.0
        %700 = vmatprep.subr.mxu0 0.0
        %701 = vmatpush1.msra.mxu0 0.0
        %702 = vmatprep.subr.mxu0 0.0
        %703 = vmatpush1.msra.mxu0 0.0
        %704 = vmatprep.subr.mxu0 0.0
        %705 = vmatpush1.msra.mxu0 0.0
        %706 = vmatprep.subr.mxu0 0.0
        %707 = vmatpush1.msra.mxu0 0.0
        %708 = vmatprep.subr.mxu0 0.0
        %709 = vmatpush1.msra.mxu0 0.0
        %710 = vmatprep.subr.mxu0 0.0
        %711 = vmatpush1.msra.mxu0 0.0
        %712 = vmatprep.mubr.f32.mxu0 0.0
        %713 = vmatmul.mubr.f32.gmra.mrb[0].mxu0 %v609
        %v714 = vpop.f32.mrb[0].mxu0
        %v715 = vadd.f32 %v646, %v714
        %v716 = vpop.f32.mrb[0].mxu0
        %717 = vmatprep.mubr.f32.mxu0 0.0
        %718 = vmatmul.mubr.f32.gmra.mrb[0].mxu0 %v610
        %v719 = vpop.f32.mrb[0].mxu0
        %v720 = vadd.f32 %v646, %v719
        %v721 = vpop.f32.mrb[0].mxu0
        %722 = vmatprep.mubr.f32.mxu0 0.0
        %723 = vmatmul.mubr.f32.gmra.mrb[0].mxu0 %v611
        %v724 = vpop.f32.mrb[0].mxu0
        %v725 = vadd.f32 %v646, %v724
        %v726 = vpop.f32.mrb[0].mxu0
        %727 = vmatprep.mubr.f32.mxu0 0.0
        %728 = vmatmul.mubr.f32.gmra.mrb[0].mxu0 %v612
        %v729 = vpop.f32.mrb[0].mxu0
        %v730 = vadd.f32 %v646, %v729
        %v731 = vpop.f32.mrb[0].mxu0
        %732 = vmatprep.mubr.f32.mxu0 0.0
        %733 = vmatmul.mubr.f32.gmra.mrb[0].mxu0 %v613
        %v734 = vpop.f32.mrb[0].mxu0
        %v735 = vadd.f32 %v646, %v734
        %v736 = vpop.f32.mrb[0].mxu0
        %737 = vmatprep.mubr.f32.mxu0 0.0
        %738 = vmatmul.mubr.f32.gmra.mrb[0].mxu0 %v614
        %v739 = vpop.f32.mrb[0].mxu0
        %v740 = vadd.f32 %v646, %v739
        %v741 = vpop.f32.mrb[0].mxu0
        %742 = vmatprep.mubr.f32.mxu0 0.0
        %743 = vmatmul.mubr.f32.gmra.mrb[0].mxu0 %v615
        %v744 = vpop.f32.mrb[0].mxu0
        %v745 = vadd.f32 %v646, %v744
        %v746 = vpop.f32.mrb[0].mxu0
        %747 = vmatprep.mubr.f32.mxu0 0.0
        %748 = vmatmul.mubr.f32.gmra.mrb[0].mxu0 %v616
        %v749 = vpop.f32.mrb[0].mxu0
        %v750 = vadd.f32 %v646, %v749
        %v751 = vpop.f32.mrb[0].mxu0
        %752 = vmatprep.mubr.f32.mxu0 0.0
        %753 = vmatmul.mubr.f32.gmra.mrb[0].mxu0 %v617
        %v754 = vpop.f32.mrb[0].mxu0
        %v755 = vadd.f32 %v646, %v754
        %v756 = vpop.f32.mrb[0].mxu0
        %757 = vmatprep.mubr.f32.mxu0 0.0
        %758 = vmatmul.mubr.f32.gmra.mrb[0].mxu0 %v618
        %v759 = vpop.f32.mrb[0].mxu0
        %v760 = vadd.f32 %v646, %v759
        %v761 = vpop.f32.mrb[0].mxu0
        %762 = vmatprep.mubr.f32.mxu0 0.0
        %763 = vmatmul.mubr.f32.gmra.mrb[0].mxu0 %v619
        %v764 = vpop.f32.mrb[0].mxu0
        %v765 = vadd.f32 %v646, %v764
        %v766 = vpop.f32.mrb[0].mxu0
        %767 = vmatprep.mubr.f32.mxu0 0.0
        %768 = vmatmul.mubr.f32.gmra.mrb[0].mxu0 %v620
        %v769 = vpop.f32.mrb[0].mxu0
        %v770 = vadd.f32 %v646, %v769
        %v771 = vpop.f32.mrb[0].mxu0
        %772 = vmatprep.mubr.f32.mxu0 0.0
        %773 = vmatmul.mubr.f32.gmra.mrb[0].mxu0 %v621
        %v774 = vpop.f32.mrb[0].mxu0
        %v775 = vadd.f32 %v646, %v774
        %v776 = vpop.f32.mrb[0].mxu0
        %777 = vmatprep.mubr.f32.mxu0 0.0
        %778 = vmatmul.mubr.f32.gmra.mrb[0].mxu0 %v622
        %v779 = vpop.f32.mrb[0].mxu0
        %v780 = vadd.f32 %v646, %v779
        %v781 = vpop.f32.mrb[0].mxu0
        %782 = vmatprep.mubr.f32.mxu0 0.0
        %783 = vmatmul.mubr.f32.gmra.mrb[0].mxu0 %v623
        %v784 = vpop.f32.mrb[0].mxu0
        %v785 = vadd.f32 %v646, %v784
        %v786 = vpop.f32.mrb[0].mxu0
        %787 = vmatprep.mubr.f32.mxu0 0.0
        %788 = vmatmul.mubr.f32.gmra.mrb[0].mxu0 %v624
        %v789 = vpop.f32.mrb[0].mxu0
        %v790 = vadd.f32 %v646, %v789
        %v791 = vpop.f32.mrb[0].mxu0
        %792 = vdwg.mxu0
        %v793 = vmax.f32 %v715, 0.0
        %v794 = vmax.f32 %v720, 0.0
        %v795 = vmax.f32 %v725, 0.0
        %v796 = vmax.f32 %v730, 0.0
        %v797 = vmax.f32 %v735, 0.0
        %v798 = vmax.f32 %v740, 0.0
        %v799 = vmax.f32 %v745, 0.0
        %v800 = vmax.f32 %v750, 0.0
        %v801 = vmax.f32 %v755, 0.0
        %v802 = vmax.f32 %v760, 0.0
        %v803 = vmax.f32 %v765, 0.0
        %v804 = vmax.f32 %v770, 0.0
        %v805 = vmax.f32 %v775, 0.0
        %v806 = vmax.f32 %v780, 0.0
        %v807 = vmax.f32 %v785, 0.0
        %v808 = vmax.f32 %v790, 0.0
        %809 = vmatprep.subr.mxu0 0.0
        %810 = vmatpush1.msra.mxu0 %v625
        %811 = vmatprep.subr.mxu0 0.0
        %812 = vmatpush1.msra.mxu0 %v626
        %813 = vmatprep.subr.mxu0 0.0
        %814 = vmatpush1.msra.mxu0 %v627
        %815 = vmatprep.subr.mxu0 0.0
        %816 = vmatpush1.msra.mxu0 %v628
        %817 = vmatprep.subr.mxu0 0.0
        %818 = vmatpush1.msra.mxu0 %v629
        %819 = vmatprep.subr.mxu0 0.0
        %820 = vmatpush1.msra.mxu0 %v630
        %821 = vmatprep.subr.mxu0 0.0
        %822 = vmatpush1.msra.mxu0 %v631
        %823 = vmatprep.subr.mxu0 0.0
        %824 = vmatpush1.msra.mxu0 %v632
        %825 = vmatprep.subr.mxu0 0.0
        %826 = vmatpush1.msra.mxu0 %v633
        %827 = vmatprep.subr.mxu0 0.0
        %828 = vmatpush1.msra.mxu0 %v634
        %829 = vmatprep.subr.mxu0 0.0
        %830 = vmatpush1.msra.mxu0 %v635
        %831 = vmatprep.subr.mxu0 0.0
        %832 = vmatpush1.msra.mxu0 %v636
        %833 = vmatprep.subr.mxu0 0.0
        %834 = vmatpush1.msra.mxu0 %v637
        %835 = vmatprep.subr.mxu0 0.0
        %836 = vmatpush1.msra.mxu0 %v638
        %837 = vmatprep.subr.mxu0 0.0
        %838 = vmatpush1.msra.mxu0 %v639
        %839 = vmatprep.subr.mxu0 0.0
        %840 = vmatpush1.msra.mxu0 %v640
        %841 = vmatprep.subr.mxu0 0.0
        %842 = vmatpush1.msra.mxu0 0.0
        %843 = vmatprep.subr.mxu0 0.0
        %844 = vmatpush1.msra.mxu0 0.0
        %845 = vmatprep.subr.mxu0 0.0
        %846 = vmatpush1.msra.mxu0 0.0
        %847 = vmatprep.subr.mxu0 0.0
        %848 = vmatpush1.msra.mxu0 0.0
        %849 = vmatprep.subr.mxu0 0.0
        %850 = vmatpush1.msra.mxu0 0.0
        %851 = vmatprep.subr.mxu0 0.0
        %852 = vmatpush1.msra.mxu0 0.0
        %853 = vmatprep.subr.mxu0 0.0
        %854 = vmatpush1.msra.mxu0 0.0
        %855 = vmatprep.subr.mxu0 0.0
        %856 = vmatpush1.msra.mxu0 0.0
        %857 = vmatprep.subr.mxu0 0.0
        %858 = vmatpush1.msra.mxu0 0.0
        %859 = vmatprep.subr.mxu0 0.0
        %860 = vmatpush1.msra.mxu0 0.0
        %861 = vmatprep.subr.mxu0 0.0
        %862 = vmatpush1.msra.mxu0 0.0
        %863 = vmatprep.subr.mxu0 0.0
        %864 = vmatpush1.msra.mxu0 0.0
        %865 = vmatprep.subr.mxu0 0.0
        %866 = vmatpush1.msra.mxu0 0.0
        %867 = vmatprep.subr.mxu0 0.0
        %868 = vmatpush1.msra.mxu0 0.0
        %869 = vmatprep.subr.mxu0 0.0
        %870 = vmatpush1.msra.mxu0 0.0
        %871 = vmatprep.subr.mxu0 0.0
        %872 = vmatpush1.msra.mxu0 0.0
        %873 = vmatprep.mubr.f32.mxu0 0.0
        %874 = vmatmul.mubr.f32.gmra.mrb[0].mxu0 %v793
        %v875 = vpop.f32.mrb[0].mxu0
        %v876 = vadd.f32 %v646, %v875
        %v877 = vpop.f32.mrb[0].mxu0
        %878 = vmatprep.mubr.f32.mxu0 0.0
        %879 = vmatmul.mubr.f32.gmra.mrb[0].mxu0 %v794
        %v880 = vpop.f32.mrb[0].mxu0
        %v881 = vadd.f32 %v646, %v880
        %v882 = vpop.f32.mrb[0].mxu0
        %883 = vmatprep.mubr.f32.mxu0 0.0
        %884 = vmatmul.mubr.f32.gmra.mrb[0].mxu0 %v795
        %v885 = vpop.f32.mrb[0].mxu0
        %v886 = vadd.f32 %v646, %v885
        %v887 = vpop.f32.mrb[0].mxu0
        %888 = vmatprep.mubr.f32.mxu0 0.0
        %889 = vmatmul.mubr.f32.gmra.mrb[0].mxu0 %v796
        %v890 = vpop.f32.mrb[0].mxu0
        %v891 = vadd.f32 %v646, %v890
        %v892 = vpop.f32.mrb[0].mxu0
        %893 = vmatprep.mubr.f32.mxu0 0.0
        %894 = vmatmul.mubr.f32.gmra.mrb[0].mxu0 %v797
        %v895 = vpop.f32.mrb[0].mxu0
        %v896 = vadd.f32 %v646, %v895
        %v897 = vpop.f32.mrb[0].mxu0
        %898 = vmatprep.mubr.f32.mxu0 0.0
        %899 = vmatmul.mubr.f32.gmra.mrb[0].mxu0 %v798
        %v900 = vpop.f32.mrb[0].mxu0
        %v901 = vadd.f32 %v646, %v900
        %v902 = vpop.f32.mrb[0].mxu0
        %903 = vmatprep.mubr.f32.mxu0 0.0
        %904 = vmatmul.mubr.f32.gmra.mrb[0].mxu0 %v799
        %v905 = vpop.f32.mrb[0].mxu0
        %v906 = vadd.f32 %v646, %v905
        %v907 = vpop.f32.mrb[0].mxu0
        %908 = vmatprep.mubr.f32.mxu0 0.0
        %909 = vmatmul.mubr.f32.gmra.mrb[0].mxu0 %v800
        %v910 = vpop.f32.mrb[0].mxu0
        %v911 = vadd.f32 %v646, %v910
        %v912 = vpop.f32.mrb[0].mxu0
        %913 = vmatprep.mubr.f32.mxu0 0.0
        %914 = vmatmul.mubr.f32.gmra.mrb[0].mxu0 %v801
        %v915 = vpop.f32.mrb[0].mxu0
        %v916 = vadd.f32 %v646, %v915
        %v917 = vpop.f32.mrb[0].mxu0
        %918 = vmatprep.mubr.f32.mxu0 0.0
        %919 = vmatmul.mubr.f32.gmra.mrb[0].mxu0 %v802
        %v920 = vpop.f32.mrb[0].mxu0
        %v921 = vadd.f32 %v646, %v920
        %v922 = vpop.f32.mrb[0].mxu0
        %923 = vmatprep.mubr.f32.mxu0 0.0
        %924 = vmatmul.mubr.f32.gmra.mrb[0].mxu0 %v803
        %v925 = vpop.f32.mrb[0].mxu0
        %v926 = vadd.f32 %v646, %v925
        %v927 = vpop.f32.mrb[0].mxu0
        %928 = vmatprep.mubr.f32.mxu0 0.0
        %929 = vmatmul.mubr.f32.gmra.mrb[0].mxu0 %v804
        %v930 = vpop.f32.mrb[0].mxu0
        %v931 = vadd.f32 %v646, %v930
        %v932 = vpop.f32.mrb[0].mxu0
        %933 = vmatprep.mubr.f32.mxu0 0.0
        %934 = vmatmul.mubr.f32.gmra.mrb[0].mxu0 %v805
        %v935 = vpop.f32.mrb[0].mxu0
        %v936 = vadd.f32 %v646, %v935
        %v937 = vpop.f32.mrb[0].mxu0
        %938 = vmatprep.mubr.f32.mxu0 0.0
        %939 = vmatmul.mubr.f32.gmra.mrb[0].mxu0 %v806
        %v940 = vpop.f32.mrb[0].mxu0
        %v941 = vadd.f32 %v646, %v940
        %v942 = vpop.f32.mrb[0].mxu0
        %943 = vmatprep.mubr.f32.mxu0 0.0
        %944 = vmatmul.mubr.f32.gmra.mrb[0].mxu0 %v807
        %v945 = vpop.f32.mrb[0].mxu0
        %v946 = vadd.f32 %v646, %v945
        %v947 = vpop.f32.mrb[0].mxu0
        %948 = vmatprep.mubr.f32.mxu0 0.0
        %949 = vmatmul.mubr.f32.gmra.mrb[0].mxu0 %v808
        %v950 = vpop.f32.mrb[0].mxu0
        %v951 = vadd.f32 %v646, %v950
        %v952 = vpop.f32.mrb[0].mxu0
        %953 = vdwg.mxu0
        %v954 = vmax.f32 %v876, 0.0
        %v955 = vmax.f32 %v881, 0.0
        %v956 = vmax.f32 %v886, 0.0
        %v957 = vmax.f32 %v891, 0.0
        %v958 = vmax.f32 %v896, 0.0
        %v959 = vmax.f32 %v901, 0.0
        %v960 = vmax.f32 %v906, 0.0
        %v961 = vmax.f32 %v911, 0.0
        %v962 = vmax.f32 %v916, 0.0
        %v963 = vmax.f32 %v921, 0.0
        %v964 = vmax.f32 %v926, 0.0
        %v965 = vmax.f32 %v931, 0.0
        %v966 = vmax.f32 %v936, 0.0
        %v967 = vmax.f32 %v941, 0.0
        %v968 = vmax.f32 %v946, 0.0
        %v969 = vmax.f32 %v951, 0.0
        %v970 = vld [vmem:[%s371] sm:$0xff]
        %v971 = vld [vmem:[%s371 + $0x8] sm:$0xff]
        %v972 = vld [vmem:[%s371 + $0x10] sm:$0xff]
        %v973 = vld [vmem:[%s371 + $0x18] sm:$0xff]
        %v974 = vld [vmem:[%s371 + $0x20] sm:$0xff]
        %v975 = vld [vmem:[%s371 + $0x28] sm:$0xff]
        %v976 = vld [vmem:[%s371 + $0x30] sm:$0xff]
        %v977 = vld [vmem:[%s371 + $0x38] sm:$0xff]
        %v978 = vld [vmem:[%s371 + $0x40] sm:$0xff]
        %v979 = vld [vmem:[%s371 + $0x48] sm:$0xff]
        %v980 = vld [vmem:[%s371 + $0x50] sm:$0xff]
        %v981 = vld [vmem:[%s371 + $0x58] sm:$0xff]
        %v982 = vld [vmem:[%s371 + $0x60] sm:$0xff]
        %v983 = vld [vmem:[%s371 + $0x68] sm:$0xff]
        %v984 = vld [vmem:[%s371 + $0x70] sm:$0xff]
        %v985 = vld [vmem:[%s371 + $0x78] sm:$0xff]
        %v986 = vld [vmem:[%s371 + $0x80] sm:$0xff]
        %v987 = vld [vmem:[%s371 + $0x88] sm:$0xff]
        %v988 = vld [vmem:[%s371 + $0x90] sm:$0xff]
        %v989 = vld [vmem:[%s371 + $0x98] sm:$0xff]
        %v990 = vld [vmem:[%s371 + $0xa0] sm:$0xff]
        %v991 = vld [vmem:[%s371 + $0xa8] sm:$0xff]
        %v992 = vld [vmem:[%s371 + $0xb0] sm:$0xff]
        %v993 = vld [vmem:[%s371 + $0xb8] sm:$0xff]
        %v994 = vld [vmem:[%s371 + $0xc0] sm:$0xff]
        %v995 = vld [vmem:[%s371 + $0xc8] sm:$0xff]
        %v996 = vld [vmem:[%s371 + $0xd0] sm:$0xff]
        %v997 = vld [vmem:[%s371 + $0xd8] sm:$0xff]
        %v998 = vld [vmem:[%s371 + $0xe0] sm:$0xff]
        %v999 = vld [vmem:[%s371 + $0xe8] sm:$0xff]
        %v1000 = vld [vmem:[%s371 + $0xf0] sm:$0xff]
        %v1001 = vld [vmem:[%s371 + $0xf8] sm:$0xff]
        %v1002 = vld [vmem:[%s371 + $0x100] sm:$0xff]
        %v1003 = vld [vmem:[%s371 + $0x108] sm:$0xff]
        %v1004 = vld [vmem:[%s371 + $0x110] sm:$0xff]
        %v1005 = vld [vmem:[%s371 + $0x118] sm:$0xff]
        %v1006 = vld [vmem:[%s371 + $0x120] sm:$0xff]
        %v1007 = vld [vmem:[%s371 + $0x128] sm:$0xff]
        %v1008 = vld [vmem:[%s371 + $0x130] sm:$0xff]
        %v1009 = vld [vmem:[%s371 + $0x138] sm:$0xff]
        %v1010 = vld [vmem:[%s371 + $0x140] sm:$0xff]
        %v1011 = vld [vmem:[%s371 + $0x148] sm:$0xff]
        %v1012 = vld [vmem:[%s371 + $0x150] sm:$0xff]
        %v1013 = vld [vmem:[%s371 + $0x158] sm:$0xff]
        %v1014 = vld [vmem:[%s371 + $0x160] sm:$0xff]
        %v1015 = vld [vmem:[%s371 + $0x168] sm:$0xff]
        %v1016 = vld [vmem:[%s371 + $0x170] sm:$0xff]
        %v1017 = vld [vmem:[%s371 + $0x178] sm:$0xff]
        %v1018 = vmul.f32 %v609, %v970
        %v1019 = vmul.f32 %v610, %v971
        %v1020 = vmul.f32 %v611, %v972
        %v1021 = vmul.f32 %v612, %v973
        %v1022 = vmul.f32 %v613, %v974
        %v1023 = vmul.f32 %v614, %v975
        %v1024 = vmul.f32 %v615, %v976
        %v1025 = vmul.f32 %v616, %v977
        %v1026 = vmul.f32 %v617, %v978
        %v1027 = vmul.f32 %v618, %v979
        %v1028 = vmul.f32 %v619, %v980
        %v1029 = vmul.f32 %v620, %v981
        %v1030 = vmul.f32 %v621, %v982
        %v1031 = vmul.f32 %v622, %v983
        %v1032 = vmul.f32 %v623, %v984
        %v1033 = vmul.f32 %v624, %v985
        %v1034 = vrot.slane %v1018, 4
        %v1035 = vmax.f32 %v1018, %v1034
        %v1036 = vrot.slane %v1035, 2
        %v1037 = vmax.f32 %v1035, %v1036
        %v1038 = vrot.slane %v1037, 1
        %v1039 = vmax.f32 %v1037, %v1038
        %v1040 = vrot.slane %v1019, 4
        %v1041 = vmax.f32 %v1019, %v1040
        %v1042 = vrot.slane %v1041, 2
        %v1043 = vmax.f32 %v1041, %v1042
        %v1044 = vrot.slane %v1043, 1
        %v1045 = vmax.f32 %v1043, %v1044
        %v1046 = vrot.slane %v1020, 4
        %v1047 = vmax.f32 %v1020, %v1046
        %v1048 = vrot.slane %v1047, 2
        %v1049 = vmax.f32 %v1047, %v1048
        %v1050 = vrot.slane %v1049, 1
        %v1051 = vmax.f32 %v1049, %v1050
        %v1052 = vrot.slane %v1021, 4
        %v1053 = vmax.f32 %v1021, %v1052
        %v1054 = vrot.slane %v1053, 2
        %v1055 = vmax.f32 %v1053, %v1054
        %v1056 = vrot.slane %v1055, 1
        %v1057 = vmax.f32 %v1055, %v1056
        %v1058 = vrot.slane %v1022, 4
        %v1059 = vmax.f32 %v1022, %v1058
        %v1060 = vrot.slane %v1059, 2
        %v1061 = vmax.f32 %v1059, %v1060
        %v1062 = vrot.slane %v1061, 1
        %v1063 = vmax.f32 %v1061, %v1062
        %v1064 = vrot.slane %v1023, 4
        %v1065 = vmax.f32 %v1023, %v1064
        %v1066 = vrot.slane %v1065, 2
        %v1067 = vmax.f32 %v1065, %v1066
        %v1068 = vrot.slane %v1067, 1
        %v1069 = vmax.f32 %v1067, %v1068
        %v1070 = vrot.slane %v1024, 4
        %v1071 = vmax.f32 %v1024, %v1070
        %v1072 = vrot.slane %v1071, 2
        %v1073 = vmax.f32 %v1071, %v1072
        %v1074 = vrot.slane %v1073, 1
        %v1075 = vmax.f32 %v1073, %v1074
        %v1076 = vrot.slane %v1025, 4
        %v1077 = vmax.f32 %v1025, %v1076
        %v1078 = vrot.slane %v1077, 2
        %v1079 = vmax.f32 %v1077, %v1078
        %v1080 = vrot.slane %v1079, 1
        %v1081 = vmax.f32 %v1079, %v1080
        %v1082 = vrot.slane %v1026, 4
        %v1083 = vmax.f32 %v1026, %v1082
        %v1084 = vrot.slane %v1083, 2
        %v1085 = vmax.f32 %v1083, %v1084
        %v1086 = vrot.slane %v1085, 1
        %v1087 = vmax.f32 %v1085, %v1086
        %v1088 = vrot.slane %v1027, 4
        %v1089 = vmax.f32 %v1027, %v1088
        %v1090 = vrot.slane %v1089, 2
        %v1091 = vmax.f32 %v1089, %v1090
        %v1092 = vrot.slane %v1091, 1
        %v1093 = vmax.f32 %v1091, %v1092
        %v1094 = vrot.slane %v1028, 4
        %v1095 = vmax.f32 %v1028, %v1094
        %v1096 = vrot.slane %v1095, 2
        %v1097 = vmax.f32 %v1095, %v1096
        %v1098 = vrot.slane %v1097, 1
        %v1099 = vmax.f32 %v1097, %v1098
        %v1100 = vrot.slane %v1029, 4
        %v1101 = vmax.f32 %v1029, %v1100
        %v1102 = vrot.slane %v1101, 2
        %v1103 = vmax.f32 %v1101, %v1102
        %v1104 = vrot.slane %v1103, 1
        %v1105 = vmax.f32 %v1103, %v1104
        %v1106 = vrot.slane %v1030, 4
        %v1107 = vmax.f32 %v1030, %v1106
        %v1108 = vrot.slane %v1107, 2
        %v1109 = vmax.f32 %v1107, %v1108
        %v1110 = vrot.slane %v1109, 1
        %v1111 = vmax.f32 %v1109, %v1110
        %v1112 = vrot.slane %v1031, 4
        %v1113 = vmax.f32 %v1031, %v1112
        %v1114 = vrot.slane %v1113, 2
        %v1115 = vmax.f32 %v1113, %v1114
        %v1116 = vrot.slane %v1115, 1
        %v1117 = vmax.f32 %v1115, %v1116
        %v1118 = vrot.slane %v1032, 4
        %v1119 = vmax.f32 %v1032, %v1118
        %v1120 = vrot.slane %v1119, 2
        %v1121 = vmax.f32 %v1119, %v1120
        %v1122 = vrot.slane %v1121, 1
        %v1123 = vmax.f32 %v1121, %v1122
        %v1124 = vrot.slane %v1033, 4
        %v1125 = vmax.f32 %v1033, %v1124
        %v1126 = vrot.slane %v1125, 2
        %v1127 = vmax.f32 %v1125, %v1126
        %v1128 = vrot.slane %v1127, 1
        %v1129 = vmax.f32 %v1127, %v1128
        %v1130 = vmul.f32 %v793, %v986
        %v1131 = vmul.f32 %v794, %v987
        %v1132 = vmul.f32 %v795, %v988
        %v1133 = vmul.f32 %v796, %v989
        %v1134 = vmul.f32 %v797, %v990
        %v1135 = vmul.f32 %v798, %v991
        %v1136 = vmul.f32 %v799, %v992
        %v1137 = vmul.f32 %v800, %v993
        %v1138 = vmul.f32 %v801, %v994
        %v1139 = vmul.f32 %v802, %v995
        %v1140 = vmul.f32 %v803, %v996
        %v1141 = vmul.f32 %v804, %v997
        %v1142 = vmul.f32 %v805, %v998
        %v1143 = vmul.f32 %v806, %v999
        %v1144 = vmul.f32 %v807, %v1000
        %v1145 = vmul.f32 %v808, %v1001
        %v1146 = vrot.slane %v1130, 4
        %v1147 = vmax.f32 %v1130, %v1146
        %v1148 = vrot.slane %v1147, 2
        %v1149 = vmax.f32 %v1147, %v1148
        %v1150 = vrot.slane %v1149, 1
        %v1151 = vmax.f32 %v1149, %v1150
        %v1152 = vrot.slane %v1131, 4
        %v1153 = vmax.f32 %v1131, %v1152
        %v1154 = vrot.slane %v1153, 2
        %v1155 = vmax.f32 %v1153, %v1154
        %v1156 = vrot.slane %v1155, 1
        %v1157 = vmax.f32 %v1155, %v1156
        %v1158 = vrot.slane %v1132, 4
        %v1159 = vmax.f32 %v1132, %v1158
        %v1160 = vrot.slane %v1159, 2
        %v1161 = vmax.f32 %v1159, %v1160
        %v1162 = vrot.slane %v1161, 1
        %v1163 = vmax.f32 %v1161, %v1162
        %v1164 = vrot.slane %v1133, 4
        %v1165 = vmax.f32 %v1133, %v1164
        %v1166 = vrot.slane %v1165, 2
        %v1167 = vmax.f32 %v1165, %v1166
        %v1168 = vrot.slane %v1167, 1
        %v1169 = vmax.f32 %v1167, %v1168
        %v1170 = vrot.slane %v1134, 4
        %v1171 = vmax.f32 %v1134, %v1170
        %v1172 = vrot.slane %v1171, 2
        %v1173 = vmax.f32 %v1171, %v1172
        %v1174 = vrot.slane %v1173, 1
        %v1175 = vmax.f32 %v1173, %v1174
        %v1176 = vrot.slane %v1135, 4
        %v1177 = vmax.f32 %v1135, %v1176
        %v1178 = vrot.slane %v1177, 2
        %v1179 = vmax.f32 %v1177, %v1178
        %v1180 = vrot.slane %v1179, 1
        %v1181 = vmax.f32 %v1179, %v1180
        %v1182 = vrot.slane %v1136, 4
        %v1183 = vmax.f32 %v1136, %v1182
        %v1184 = vrot.slane %v1183, 2
        %v1185 = vmax.f32 %v1183, %v1184
        %v1186 = vrot.slane %v1185, 1
        %v1187 = vmax.f32 %v1185, %v1186
        %v1188 = vrot.slane %v1137, 4
        %v1189 = vmax.f32 %v1137, %v1188
        %v1190 = vrot.slane %v1189, 2
        %v1191 = vmax.f32 %v1189, %v1190
        %v1192 = vrot.slane %v1191, 1
        %v1193 = vmax.f32 %v1191, %v1192
        %v1194 = vrot.slane %v1138, 4
        %v1195 = vmax.f32 %v1138, %v1194
        %v1196 = vrot.slane %v1195, 2
        %v1197 = vmax.f32 %v1195, %v1196
        %v1198 = vrot.slane %v1197, 1
        %v1199 = vmax.f32 %v1197, %v1198
        %v1200 = vrot.slane %v1139, 4
        %v1201 = vmax.f32 %v1139, %v1200
        %v1202 = vrot.slane %v1201, 2
        %v1203 = vmax.f32 %v1201, %v1202
        %v1204 = vrot.slane %v1203, 1
        %v1205 = vmax.f32 %v1203, %v1204
        %v1206 = vrot.slane %v1140, 4
        %v1207 = vmax.f32 %v1140, %v1206
        %v1208 = vrot.slane %v1207, 2
        %v1209 = vmax.f32 %v1207, %v1208
        %v1210 = vrot.slane %v1209, 1
        %v1211 = vmax.f32 %v1209, %v1210
        %v1212 = vrot.slane %v1141, 4
        %v1213 = vmax.f32 %v1141, %v1212
        %v1214 = vrot.slane %v1213, 2
        %v1215 = vmax.f32 %v1213, %v1214
        %v1216 = vrot.slane %v1215, 1
        %v1217 = vmax.f32 %v1215, %v1216
        %v1218 = vrot.slane %v1142, 4
        %v1219 = vmax.f32 %v1142, %v1218
        %v1220 = vrot.slane %v1219, 2
        %v1221 = vmax.f32 %v1219, %v1220
        %v1222 = vrot.slane %v1221, 1
        %v1223 = vmax.f32 %v1221, %v1222
        %v1224 = vrot.slane %v1143, 4
        %v1225 = vmax.f32 %v1143, %v1224
        %v1226 = vrot.slane %v1225, 2
        %v1227 = vmax.f32 %v1225, %v1226
        %v1228 = vrot.slane %v1227, 1
        %v1229 = vmax.f32 %v1227, %v1228
        %v1230 = vrot.slane %v1144, 4
        %v1231 = vmax.f32 %v1144, %v1230
        %v1232 = vrot.slane %v1231, 2
        %v1233 = vmax.f32 %v1231, %v1232
        %v1234 = vrot.slane %v1233, 1
        %v1235 = vmax.f32 %v1233, %v1234
        %v1236 = vrot.slane %v1145, 4
        %v1237 = vmax.f32 %v1145, %v1236
        %v1238 = vrot.slane %v1237, 2
        %v1239 = vmax.f32 %v1237, %v1238
        %v1240 = vrot.slane %v1239, 1
        %v1241 = vmax.f32 %v1239, %v1240
        %v1242 = vadd.f32 %v1039, %v1151
        %v1243 = vadd.f32 %v1045, %v1157
        %v1244 = vadd.f32 %v1051, %v1163
        %v1245 = vadd.f32 %v1057, %v1169
        %v1246 = vadd.f32 %v1063, %v1175
        %v1247 = vadd.f32 %v1069, %v1181
        %v1248 = vadd.f32 %v1075, %v1187
        %v1249 = vadd.f32 %v1081, %v1193
        %v1250 = vadd.f32 %v1087, %v1199
        %v1251 = vadd.f32 %v1093, %v1205
        %v1252 = vadd.f32 %v1099, %v1211
        %v1253 = vadd.f32 %v1105, %v1217
        %v1254 = vadd.f32 %v1111, %v1223
        %v1255 = vadd.f32 %v1117, %v1229
        %v1256 = vadd.f32 %v1123, %v1235
        %v1257 = vadd.f32 %v1129, %v1241
        %v1258 = vmul.f32 %v954, %v1002
        %v1259 = vmul.f32 %v955, %v1003
        %v1260 = vmul.f32 %v956, %v1004
        %v1261 = vmul.f32 %v957, %v1005
        %v1262 = vmul.f32 %v958, %v1006
        %v1263 = vmul.f32 %v959, %v1007
        %v1264 = vmul.f32 %v960, %v1008
        %v1265 = vmul.f32 %v961, %v1009
        %v1266 = vmul.f32 %v962, %v1010
        %v1267 = vmul.f32 %v963, %v1011
        %v1268 = vmul.f32 %v964, %v1012
        %v1269 = vmul.f32 %v965, %v1013
        %v1270 = vmul.f32 %v966, %v1014
        %v1271 = vmul.f32 %v967, %v1015
        %v1272 = vmul.f32 %v968, %v1016
        %v1273 = vmul.f32 %v969, %v1017
        %v1274 = vrot.slane %v1258, 4
        %v1275 = vmax.f32 %v1258, %v1274
        %v1276 = vrot.slane %v1275, 2
        %v1277 = vmax.f32 %v1275, %v1276
        %v1278 = vrot.slane %v1277, 1
        %v1279 = vmax.f32 %v1277, %v1278
        %v1280 = vrot.slane %v1259, 4
        %v1281 = vmax.f32 %v1259, %v1280
        %v1282 = vrot.slane %v1281, 2
        %v1283 = vmax.f32 %v1281, %v1282
        %v1284 = vrot.slane %v1283, 1
        %v1285 = vmax.f32 %v1283, %v1284
        %v1286 = vrot.slane %v1260, 4
        %v1287 = vmax.f32 %v1260, %v1286
        %v1288 = vrot.slane %v1287, 2
        %v1289 = vmax.f32 %v1287, %v1288
        %v1290 = vrot.slane %v1289, 1
        %v1291 = vmax.f32 %v1289, %v1290
        %v1292 = vrot.slane %v1261, 4
        %v1293 = vmax.f32 %v1261, %v1292
        %v1294 = vrot.slane %v1293, 2
        %v1295 = vmax.f32 %v1293, %v1294
        %v1296 = vrot.slane %v1295, 1
        %v1297 = vmax.f32 %v1295, %v1296
        %v1298 = vrot.slane %v1262, 4
        %v1299 = vmax.f32 %v1262, %v1298
        %v1300 = vrot.slane %v1299, 2
        %v1301 = vmax.f32 %v1299, %v1300
        %v1302 = vrot.slane %v1301, 1
        %v1303 = vmax.f32 %v1301, %v1302
        %v1304 = vrot.slane %v1263, 4
        %v1305 = vmax.f32 %v1263, %v1304
        %v1306 = vrot.slane %v1305, 2
        %v1307 = vmax.f32 %v1305, %v1306
        %v1308 = vrot.slane %v1307, 1
        %v1309 = vmax.f32 %v1307, %v1308
        %v1310 = vrot.slane %v1264, 4
        %v1311 = vmax.f32 %v1264, %v1310
        %v1312 = vrot.slane %v1311, 2
        %v1313 = vmax.f32 %v1311, %v1312
        %v1314 = vrot.slane %v1313, 1
        %v1315 = vmax.f32 %v1313, %v1314
        %v1316 = vrot.slane %v1265, 4
        %v1317 = vmax.f32 %v1265, %v1316
        %v1318 = vrot.slane %v1317, 2
        %v1319 = vmax.f32 %v1317, %v1318
        %v1320 = vrot.slane %v1319, 1
        %v1321 = vmax.f32 %v1319, %v1320
        %v1322 = vrot.slane %v1266, 4
        %v1323 = vmax.f32 %v1266, %v1322
        %v1324 = vrot.slane %v1323, 2
        %v1325 = vmax.f32 %v1323, %v1324
        %v1326 = vrot.slane %v1325, 1
        %v1327 = vmax.f32 %v1325, %v1326
        %v1328 = vrot.slane %v1267, 4
        %v1329 = vmax.f32 %v1267, %v1328
        %v1330 = vrot.slane %v1329, 2
        %v1331 = vmax.f32 %v1329, %v1330
        %v1332 = vrot.slane %v1331, 1
        %v1333 = vmax.f32 %v1331, %v1332
        %v1334 = vrot.slane %v1268, 4
        %v1335 = vmax.f32 %v1268, %v1334
        %v1336 = vrot.slane %v1335, 2
        %v1337 = vmax.f32 %v1335, %v1336
        %v1338 = vrot.slane %v1337, 1
        %v1339 = vmax.f32 %v1337, %v1338
        %v1340 = vrot.slane %v1269, 4
        %v1341 = vmax.f32 %v1269, %v1340
        %v1342 = vrot.slane %v1341, 2
        %v1343 = vmax.f32 %v1341, %v1342
        %v1344 = vrot.slane %v1343, 1
        %v1345 = vmax.f32 %v1343, %v1344
        %v1346 = vrot.slane %v1270, 4
        %v1347 = vmax.f32 %v1270, %v1346
        %v1348 = vrot.slane %v1347, 2
        %v1349 = vmax.f32 %v1347, %v1348
        %v1350 = vrot.slane %v1349, 1
        %v1351 = vmax.f32 %v1349, %v1350
        %v1352 = vrot.slane %v1271, 4
        %v1353 = vmax.f32 %v1271, %v1352
        %v1354 = vrot.slane %v1353, 2
        %v1355 = vmax.f32 %v1353, %v1354
        %v1356 = vrot.slane %v1355, 1
        %v1357 = vmax.f32 %v1355, %v1356
        %v1358 = vrot.slane %v1272, 4
        %v1359 = vmax.f32 %v1272, %v1358
        %v1360 = vrot.slane %v1359, 2
        %v1361 = vmax.f32 %v1359, %v1360
        %v1362 = vrot.slane %v1361, 1
        %v1363 = vmax.f32 %v1361, %v1362
        %v1364 = vrot.slane %v1273, 4
        %v1365 = vmax.f32 %v1273, %v1364
        %v1366 = vrot.slane %v1365, 2
        %v1367 = vmax.f32 %v1365, %v1366
        %v1368 = vrot.slane %v1367, 1
        %v1369 = vmax.f32 %v1367, %v1368
        %v1370 = vadd.f32 %v1242, %v1279
        %v1371 = vadd.f32 %v1243, %v1285
        %v1372 = vadd.f32 %v1244, %v1291
        %v1373 = vadd.f32 %v1245, %v1297
        %v1374 = vadd.f32 %v1246, %v1303
        %v1375 = vadd.f32 %v1247, %v1309
        %v1376 = vadd.f32 %v1248, %v1315
        %v1377 = vadd.f32 %v1249, %v1321
        %v1378 = vadd.f32 %v1250, %v1327
        %v1379 = vadd.f32 %v1251, %v1333
        %v1380 = vadd.f32 %v1252, %v1339
        %v1381 = vadd.f32 %v1253, %v1345
        %v1382 = vadd.f32 %v1254, %v1351
        %v1383 = vadd.f32 %v1255, %v1357
        %v1384 = vadd.f32 %v1256, %v1363
        %v1385 = vadd.f32 %v1257, %v1369
        %v1386 = vmul.f32 %v1370, 2.0
        %v1387 = vmul.f32 %v1371, 2.0
        %v1388 = vmul.f32 %v1372, 2.0
        %v1389 = vmul.f32 %v1373, 2.0
        %v1390 = vmul.f32 %v1374, 2.0
        %v1391 = vmul.f32 %v1375, 2.0
        %v1392 = vmul.f32 %v1376, 2.0
        %v1393 = vmul.f32 %v1377, 2.0
        %v1394 = vmul.f32 %v1378, 2.0
        %v1395 = vmul.f32 %v1379, 2.0
        %v1396 = vmul.f32 %v1380, 2.0
        %v1397 = vmul.f32 %v1381, 2.0
        %v1398 = vmul.f32 %v1382, 2.0
        %v1399 = vmul.f32 %v1383, 2.0
        %v1400 = vmul.f32 %v1384, 2.0
        %v1401 = vmul.f32 %v1385, 2.0
        %v1402 = vld [vmem:[%s6] sm:$0x1]
        %v1404 = vlaneseq
        %v1405 = vshrl.u32 %v1404, 7
        %v1406 = vsub.s32 0, %v1405
        %v1407 = vrot.slane %v1402, %v1406
        %v1409 = vmul.f32 %v1386, %v1407
        %v1410 = vmul.f32 %v1387, %v1407
        %v1411 = vmul.f32 %v1388, %v1407
        %v1412 = vmul.f32 %v1389, %v1407
        %v1413 = vmul.f32 %v1390, %v1407
        %v1414 = vmul.f32 %v1391, %v1407
        %v1415 = vmul.f32 %v1392, %v1407
        %v1416 = vmul.f32 %v1393, %v1407
        %v1417 = vmul.f32 %v1394, %v1407
        %v1418 = vmul.f32 %v1395, %v1407
        %v1419 = vmul.f32 %v1396, %v1407
        %v1420 = vmul.f32 %v1397, %v1407
        %v1421 = vmul.f32 %v1398, %v1407
        %v1422 = vmul.f32 %v1399, %v1407
        %v1423 = vmul.f32 %v1400, %v1407
        %v1424 = vmul.f32 %v1401, %v1407
        %v1441 = vrot.slane %v1410, 7
        %vm1442 = vcmask 1041409
        %v1443 = vsel %vm1442, %v1441, %v1409
        %v1444 = vrot.slane %v1411, 6
        %vm1445 = vcmask 1042434
        %v1446 = vsel %vm1445, %v1444, %v1443
        %v1447 = vrot.slane %v1412, 5
        %vm1448 = vcmask 1043459
        %v1449 = vsel %vm1448, %v1447, %v1446
        %v1450 = vrot.slane %v1413, 4
        %vm1451 = vcmask 1044484
        %v1452 = vsel %vm1451, %v1450, %v1449
        %v1453 = vrot.slane %v1414, 3
        %vm1454 = vcmask 1045509
        %v1455 = vsel %vm1454, %v1453, %v1452
        %v1456 = vrot.slane %v1415, 2
        %vm1457 = vcmask 1046534
        %v1458 = vsel %vm1457, %v1456, %v1455
        %v1459 = vrot.slane %v1416, 1
        %vm1460 = vcmask 1047559
        %v1461 = vsel %vm1460, %v1459, %v1458
        %v1462 = vrot.slane %v1418, 7
        %v1463 = vsel %vm1442, %v1462, %v1417
        %v1464 = vrot.slane %v1419, 6
        %v1465 = vsel %vm1445, %v1464, %v1463
        %v1466 = vrot.slane %v1420, 5
        %v1467 = vsel %vm1448, %v1466, %v1465
        %v1468 = vrot.slane %v1421, 4
        %v1469 = vsel %vm1451, %v1468, %v1467
        %v1470 = vrot.slane %v1422, 3
        %v1471 = vsel %vm1454, %v1470, %v1469
        %v1472 = vrot.slane %v1423, 2
        %v1473 = vsel %vm1457, %v1472, %v1471
        %v1474 = vrot.slane %v1424, 1
        %v1475 = vsel %vm1460, %v1474, %v1473
        %1478 = vadd.xlane.f32.xlu0 %v1461
        %v1479 = vpop.xlane.xlu0 %1478
        %1480 = vadd.xlane.f32.xlu0 %v1475
        %v1481 = vpop.xlane.xlu0 %1480
        %v1482 = vld [vmem:[#allocation2] sm:$0x1]
        %v1484 = vlaneseq
        %v1485 = vshrl.u32 %v1484, 7
        %v1486 = vsub.s32 0, %v1485
        %v1487 = vrot.slane %v1482, %v1486
        %v1489 = vadd.f32 %v1479, %v1487
        %v1490 = vadd.f32 %v1481, %v1487
        %v1491 = vxor.u32 %v1489, 2147483648
        %v1492 = vxor.u32 %v1490, 2147483648
        %v1493 = vmul.f32 %v1491, 1.442695
        %v1494 = vpow.pop %v1493
        %v1495 = vmul.f32 %v1492, 1.442695
        %v1496 = vpow.pop %v1495
        %v1497 = vadd.f32 %v1494, 1.0
        %v1498 = vadd.f32 %v1496, 1.0
        %v1499 = vrcp.pop %v1497
        %v1500 = vmul.f32 1.0, %v1499
        %v1501 = vrcp.pop %v1498
        %v1502 = vmul.f32 1.0, %v1501
        %vm1503 = vcmask 7168
        %1504 = vst.msk [vmem:[%s423] sm:$0xff] %vm1503, %v1500
        %1505 = vst.msk [vmem:[%s423 + $0x8] sm:$0xff] %vm1503, %v1502
        %s1506 = smul.u32 2, %s28
        %p1507 = scmp.lt.s32.totalorder %s1506, 3
        %s1508 = scalar_select %p1507, %s1506, 3
        %s1509 = smul.addr %s1508, 8
        %s1510 = scalar_lea.vmem %s8, %s1509
        // Predicated region
        $region69: #{tpu_custom_call.1} parent=51 // pred_check
          %p1511 = pneg %p224
        $region70: #{tpu_custom_call.1} parent=51 // pred_check_branch
          %1513 = sbr.rel (%p1511) target = $region72
        $region71: #{tpu_custom_call.1} parent=51 // pred_region
          %s1514 = smul.u32 2, %s28
        $region72: #{tpu_custom_call.1} parent=51 // pred_fallthru
          _
      $region52: #{tpu_custom_call.1} parent=5 // pred_fallthru
        _
      %p1515 = scmp.le.s32.totalorder 2, %s23
      // Predicated region
      $region73: #{tpu_custom_call.1} parent=5 // pred_check
        %p1516 = pneg %p1515
      $region74: #{tpu_custom_call.1} parent=5 // pred_check_branch
        %1518 = sbr.rel (%p1516) target = $region76
      $region75: #{tpu_custom_call.1} parent=5 // pred_region
        %s1519 = ssub.s32 %s23, 2
        // Predicated region
        $region77: #{tpu_custom_call.1} parent=75 // pred_check
          %p1520 = pneg %p230
        $region78: #{tpu_custom_call.1} parent=75 // pred_check_branch
          %1522 = sbr.rel (%p1520) target = $region80
        $region79: #{tpu_custom_call.1} parent=75 // pred_region
          %s1523 = smul.u32 2, %s29
          %p1524 = scmp.lt.s32.totalorder %s1523, 3
          %s1525 = scalar_select %p1524, %s1523, 3
          %s1526 = smul.addr %s1525, 8
          %s1527 = scalar_lea.vmem %s8, %s1526
        $region80: #{tpu_custom_call.1} parent=75 // pred_fallthru
          _
      $region76: #{tpu_custom_call.1} parent=5 // pred_fallthru
        _
    $region6: #{tpu_custom_call.1} parent=1 // loop_footer
      %s27 = sadd.s32 1, %s23
    $region7: #{tpu_custom_call.1} parent=1 // loop_footer_branch
      %22 = sbr.rel target = $region3
    $region8: #{tpu_custom_call.1} parent=1 // loop_exit
      _
    %1528 = vsyncpa [#allocation4], 1
    %s1529 = scalar_lea.sflag [#allocation4], 1
    %1530 = vsyncpa %s1529, 1
    %1531 = vsyncpa [#allocation6], 1
    %s1532 = scalar_lea.sflag [#allocation6], 1
    %1533 = vsyncpa %s1532, 1
    %1534 = vsyncpa [#allocation9], 1

</llo_original>
